<compile_context>
chip_gen: v7x
topology: tpu7x:2x2x1
jax: 0.10.0
libtpu: 0.0.40
codegen_flags: <defaults>
</compile_context>

<pallas_src>
import functools

import jax
import jax.numpy as jnp
from jax import lax
from jax.experimental import pallas as pl
from jax.experimental.pallas import tpu as pltpu


def _sa_attn_kernel(x_ref, w_qkv_ref, bv_ref, wt_ref, bt_ref,
                    t_ref, tsum_ref, tsq_ref, *, channels, compute_dtype):
    """grid = (B,): one whole batch element per step.

    Computes t = trans_conv(x - v_conv(x) @ attn) for one batch plus the
    per-channel (sum, sum_sq) of t needed for train-mode BatchNorm.
    """
    C = channels
    xb = x_ref[0]                                            # (C, N) f32
    xb_c = xb.astype(compute_dtype)
    n = xb.shape[-1]

    # Stacked 1x1 convs: one (2C, C) @ (C, N) matmul instead of two tiny ones.
    qkv = jnp.dot(w_qkv_ref[...], xb_c,
                  preferred_element_type=jnp.float32)        # (2C, N) f32
    qk = qkv[:C]                                             # shared q/k conv
    xv = qkv[C:] + bv_ref[...]                               # value conv + bias

    # energy[n, m] = sum_c qk[c, n] * qk[c, m]  (equals the grouped q @ k
    # summed over groups); contract dim 0 vs dim 0, no explicit transpose.
    qk_c = qk.astype(compute_dtype)
    energy = lax.dot_general(
        qk_c, qk_c, dimension_numbers=(((0,), (0,)), ((), ())),
        preferred_element_type=jnp.float32)                  # (N, N) f32

    # Row softmax over keys (f32 statistics, EUP exp + approx reciprocal).
    row_max = jnp.max(energy, axis=-1, keepdims=True)        # (N, 1)
    e = jnp.exp(energy - row_max)
    inv_row = pl.reciprocal(jnp.sum(e, axis=-1, keepdims=True), approx=True)
    attn = (e * inv_row).astype(compute_dtype)               # (N, N)

    # Augment the value operand with a sublane-aligned 8-row tail whose first
    # row is all ones: the single (C+8, N) @ (N, N) MXU matmul then also
    # yields the attention column sums in row C (no extra XLU reduction), and
    # colsum is consistent with the accumulation (same bf16 attn operand).
    tail = (lax.broadcasted_iota(jnp.int32, (8, n), 0) == 0).astype(jnp.float32)
    xv_aug = jnp.concatenate([xv, tail], axis=0).astype(compute_dtype)
    acc = jnp.dot(xv_aug, attn, preferred_element_type=jnp.float32)  # (C+8, N)

    colsum = acc[C:C + 1, :]                                 # (1, N)
    x_r = acc[:C, :] * (1.0 / (colsum + 1e-9))               # exact column renorm

    d = (xb - x_r).astype(compute_dtype)
    t = jnp.dot(wt_ref[...], d,
                preferred_element_type=jnp.float32) + bt_ref[...]   # (C, N) f32

    t_ref[0] = t.astype(t_ref.dtype)                          # bf16 stream out
    tsum_ref[0] = jnp.sum(t, axis=-1, keepdims=True)          # f32 BN stats
    tsq_ref[0] = jnp.sum(t * t, axis=-1, keepdims=True)


def _bn_relu_residual_kernel(x_ref, t_ref, scale_ref, shift_ref, out_ref):
    """out = x + relu(scale * t + shift)  (train-mode BN folded to scale/shift)."""
    y = scale_ref[...] * t_ref[...].astype(jnp.float32) + shift_ref[...]
    out_ref[...] = (x_ref[...] + jnp.maximum(y, 0.0)).astype(out_ref.dtype)


def sa_layer(x, wqk_grouped, wv, bv, wt, bt, gamma, beta, *, gp,
             compute_dtype=jnp.bfloat16):
    """x: (B, C, N) f32.  wqk_grouped: (C, C//gp) shared q/k grouped-conv weight."""
    B, C, N = x.shape
    assert C % gp == 0 and C % 8 == 0
    cg = C // gp

    # --- glue: expand the shared grouped q/k weight to a block-diagonal (C, C)
    # and stack it with wv into one (2C, C) matmul operand.
    # TODO(synk): for large C, replace the zero-padded block diagonal with gp
    # per-group (cg, cg) matmuls (negligible waste at C=32).
    wqk_bd = jnp.zeros((C, C), jnp.float32)
    for g in range(gp):
        wqk_bd = wqk_bd.at[g * cg:(g + 1) * cg, g * cg:(g + 1) * cg].set(
            wqk_grouped[g * cg:(g + 1) * cg, :])
    cd = compute_dtype
    w_qkv = jnp.concatenate([wqk_bd, wv.astype(jnp.float32)], axis=0).astype(cd)
    wt_c = wt.astype(cd)
    bv2 = bv.reshape(C, 1).astype(jnp.float32)
    bt2 = bt.reshape(C, 1).astype(jnp.float32)

    # VMEM working-set estimate for the whole-N path ((N, N) energy resident).
    vmem_est = (2 * C * N * 4            # x input block (double-buffered)
                + 2 * C * N * 2          # t output block (double-buffered, bf16)
                + 3 * C * C * 2          # stacked qkv weight + wt (bf16)
                + 2 * C * N * 4          # qkv slab
                + (C + 8) * N * (4 + 2)  # augmented value operand (f32 + bf16)
                + 4 * N * N * 4          # energy / exp / attn temporaries
                + (C + 8) * N * 4)       # acc
    compiler_kwargs = dict(dimension_semantics=("parallel",))
    if vmem_est > (24 << 20):
        # Raise the scoped-VMEM limit (defaults: 16 MiB v5e, 32 MiB v6e/v7x).
        # TODO(synk): once the (N, N) energy slab itself no longer fits scoped
        # VMEM (N >~ 2K), fall back to flash-style query tiling over N.
        compiler_kwargs["vmem_limit_bytes"] = int(min(vmem_est * 5 // 4, 64 << 20))

    kernel1 = functools.partial(_sa_attn_kernel, channels=C, compute_dtype=cd)
    t, tsum, tsq = pl.pallas_call(
        kernel1,
        out_shape=(
            jax.ShapeDtypeStruct((B, C, N), jnp.bfloat16),   # t = trans_conv(x - x_r)
            jax.ShapeDtypeStruct((B, C, 1), jnp.float32),    # per-batch channel sum of t
            jax.ShapeDtypeStruct((B, C, 1), jnp.float32),    # per-batch channel sum of t^2
        ),
        grid=(B,),
        in_specs=[
            pl.BlockSpec((1, C, N), lambda b: (b, 0, 0)),    # x
            pl.BlockSpec((2 * C, C), lambda b: (0, 0)),      # [wqk_bd; wv] stacked
            pl.BlockSpec((C, 1), lambda b: (0, 0)),          # bv
            pl.BlockSpec((C, C), lambda b: (0, 0)),          # wt
            pl.BlockSpec((C, 1), lambda b: (0, 0)),          # bt
        ],
        out_specs=(
            pl.BlockSpec((1, C, N), lambda b: (b, 0, 0)),
            pl.BlockSpec((1, C, 1), lambda b: (b, 0, 0)),
            pl.BlockSpec((1, C, 1), lambda b: (b, 0, 0)),
        ),
        compiler_params=pltpu.CompilerParams(**compiler_kwargs),
    )(x, w_qkv, bv2, wt_c, bt2)

    # --- glue: fold train-mode BatchNorm statistics into per-channel scale/shift.
    count = B * N
    mean = jnp.sum(tsum[:, :, 0], axis=0) / count                    # (C,)
    var = jnp.sum(tsq[:, :, 0], axis=0) / count - mean * mean        # (C,)
    inv_std = 1.0 / jnp.sqrt(var + 1e-5)
    scale = (gamma * inv_std).reshape(1, C, 1).astype(jnp.float32)
    shift = (beta - mean * gamma * inv_std).reshape(1, C, 1).astype(jnp.float32)

    # HBM-bound epilogue: use the largest per-step batch block (full lane-dense
    # N per row) that stays comfortably within scoped VMEM.
    bytes_per_batch = C * N * (4 + 2 + 4)        # x(f32) + t(bf16) + out(f32)
    bb = 1
    for cand in range(B, 0, -1):
        if B % cand == 0 and cand * bytes_per_batch <= (4 << 20):
            bb = cand
            break

    out = pl.pallas_call(
        _bn_relu_residual_kernel,
        out_shape=jax.ShapeDtypeStruct((B, C, N), x.dtype),
        grid=(B // bb,),
        in_specs=[
            pl.BlockSpec((bb, C, N), lambda i: (i, 0, 0)),   # x (f32, residual)
            pl.BlockSpec((bb, C, N), lambda i: (i, 0, 0)),   # t (bf16)
            pl.BlockSpec((1, C, 1), lambda i: (0, 0, 0)),    # scale
            pl.BlockSpec((1, C, 1), lambda i: (0, 0, 0)),    # shift
        ],
        out_specs=pl.BlockSpec((bb, C, N), lambda i: (i, 0, 0)),
        compiler_params=pltpu.CompilerParams(
            dimension_semantics=("parallel",)),
    )(x, t, scale, shift)
    return out


def sa_layer_ref(x, wqk_grouped, wv, bv, wt, bt, gamma, beta, *, gp):
    """Pure-JAX f32 reference mirroring the PyTorch forward (train-mode BN)."""
    B, C, N = x.shape
    cg = C // gp
    wqk_bd = jnp.zeros((C, C), jnp.float32)
    for g in range(gp):
        wqk_bd = wqk_bd.at[g * cg:(g + 1) * cg, g * cg:(g + 1) * cg].set(
            wqk_grouped[g * cg:(g + 1) * cg, :])

    qk = jnp.einsum('oc,bcn->bon', wqk_bd, x)                       # (B, C, N)
    xq = qk.reshape(B, gp, cg, N).transpose(0, 1, 3, 2)             # (B, gp, N, cg)
    xk = qk.reshape(B, gp, cg, N)                                   # (B, gp, cg, N)
    energy = jnp.einsum('bgnc,bgcm->bnm', xq, xk)                   # (B, N, N)
    attn = jax.nn.softmax(energy, axis=-1)
    attn = attn / (1e-9 + attn.sum(axis=1, keepdims=True))
    xv = jnp.einsum('oc,bcn->bon', wv, x) + bv[None, :, None]
    xr = jnp.einsum('bcn,bnm->bcm', xv, attn)
    t = jnp.einsum('oc,bcn->bon', wt, x - xr) + bt[None, :, None]
    mean = t.mean(axis=(0, 2), keepdims=True)
    var = ((t - mean) ** 2).mean(axis=(0, 2), keepdims=True)
    y = gamma[None, :, None] * (t - mean) / jnp.sqrt(var + 1e-5) + beta[None, :, None]
    return x + jnp.maximum(y, 0.0)


if __name__ == "__main__":
    B, C, N, GP = 2, 32, 256, 4
    key = jax.random.PRNGKey(0)
    ks = jax.random.split(key, 6)

    x = jax.random.normal(ks[0], (B, C, N), jnp.float32)
    # Deterministic synthetic parameters (shapes from SA_Layer.__init__).
    wqk = jax.random.normal(ks[1], (C, C // GP), jnp.float32) * 0.2   # q_conv == k_conv weight
    wv = jax.random.normal(ks[2], (C, C), jnp.float32) * 0.1
    bv = jax.random.normal(ks[3], (C,), jnp.float32) * 0.05
    wt = jax.random.normal(ks[4], (C, C), jnp.float32) * 0.1
    bt = jax.random.normal(ks[5], (C,), jnp.float32) * 0.05
    gamma = jnp.ones((C,), jnp.float32)
    beta = jnp.zeros((C,), jnp.float32)

    run = jax.jit(functools.partial(sa_layer, gp=GP))
    out = jax.block_until_ready(run(x, wqk, wv, bv, wt, bt, gamma, beta))

    ref = sa_layer_ref(x, wqk, wv, bv, wt, bt, gamma, beta, gp=GP)
    assert out.shape == (B, C, N)
    max_err = float(jnp.max(jnp.abs(out - ref)))
    # bf16 MXU operands, bf16 t stream + approximate softmax reciprocal ->
    # loosened tolerance.
    assert jnp.allclose(out, ref, rtol=3e-2, atol=4e-2), max_err
    print("KERNEL_OK")
</pallas_src>

<mosaic_0001>
module attributes {stable_mosaic.version = 11 : i64} {
  func.func @_sa_attn_kernel(%arg0: i32, %arg1: memref<1x32x256xf32, #tpu.memory_space<vmem>>, %arg2: memref<64x32xbf16, #tpu.memory_space<vmem>>, %arg3: memref<32x1xf32, #tpu.memory_space<vmem>>, %arg4: memref<32x32xbf16, #tpu.memory_space<vmem>>, %arg5: memref<32x1xf32, #tpu.memory_space<vmem>>, %arg6: memref<1x32x256xbf16, #tpu.memory_space<vmem>>, %arg7: memref<1x32x1xf32, #tpu.memory_space<vmem>>, %arg8: memref<1x32x1xf32, #tpu.memory_space<vmem>>) attributes {dimension_semantics = [#tpu.dimension_semantics<parallel>], iteration_bounds = array<i64: 2>, scalar_prefetch = 0 : i64, scratch_operands = 0 : i64, tpu.core_type = #tpu.core_type<tc>, window_params = [{transform_indices = @transform_0, window_bounds = array<i64: 1, 32, 256>}, {pipeline_mode = #tpu.pipeline_mode<synchronous>, transform_indices = @transform_1, window_bounds = array<i64: 64, 32>}, {pipeline_mode = #tpu.pipeline_mode<synchronous>, transform_indices = @transform_2, window_bounds = array<i64: 32, 1>}, {pipeline_mode = #tpu.pipeline_mode<synchronous>, transform_indices = @transform_3, window_bounds = array<i64: 32, 32>}, {pipeline_mode = #tpu.pipeline_mode<synchronous>, transform_indices = @transform_4, window_bounds = array<i64: 32, 1>}, {transform_indices = @transform_5, window_bounds = array<i64: 1, 32, 256>}, {transform_indices = @transform_6, window_bounds = array<i64: 1, 32, 1>}, {transform_indices = @transform_7, window_bounds = array<i64: 1, 32, 1>}]} {
    %c0 = arith.constant 0 : index
    %c0_0 = arith.constant 0 : index
    %c0_1 = arith.constant 0 : index
    %0 = vector.load %arg1[%c0, %c0_0, %c0_1] : memref<1x32x256xf32, #tpu.memory_space<vmem>>, vector<1x32x256xf32>
    %1 = vector.shape_cast %0 : vector<1x32x256xf32> to vector<32x256xf32>
    %2 = arith.truncf %1 : vector<32x256xf32> to vector<32x256xbf16>
    %c0_2 = arith.constant 0 : index
    %c0_3 = arith.constant 0 : index
    %3 = vector.load %arg2[%c0_2, %c0_3] : memref<64x32xbf16, #tpu.memory_space<vmem>>, vector<64x32xbf16>
    %cst = arith.constant dense<0.000000e+00> : vector<64x256xf32>
    %4 = tpu.matmul %3, %2, %cst {dimension_numbers = #tpu.dot_dimension_numbers<[1], [0], [0], [1], [0, 0, 1, 1], [], []>} : vector<64x32xbf16>, vector<32x256xbf16>, vector<64x256xf32> -> vector<64x256xf32>
    %5 = vector.extract_strided_slice %4 {offsets = [0, 0], sizes = [32, 256], strides = [1, 1]} : vector<64x256xf32> to vector<32x256xf32>
    %6 = vector.extract_strided_slice %4 {offsets = [32, 0], sizes = [32, 256], strides = [1, 1]} : vector<64x256xf32> to vector<32x256xf32>
    %c0_4 = arith.constant 0 : index
    %c0_5 = arith.constant 0 : index
    %7 = vector.load %arg3[%c0_4, %c0_5] : memref<32x1xf32, #tpu.memory_space<vmem>>, vector<32x1xf32>
    %8 = vector.broadcast %7 : vector<32x1xf32> to vector<32x256xf32>
    %9 = arith.addf %6, %8 : vector<32x256xf32>
    %10 = arith.truncf %5 : vector<32x256xf32> to vector<32x256xbf16>
    %cst_6 = arith.constant dense<0.000000e+00> : vector<256x256xf32>
    %11 = tpu.matmul %10, %10, %cst_6 {dimension_numbers = #tpu.dot_dimension_numbers<[0], [0], [1], [1], [0, 1, 1, 1], [], []>} : vector<32x256xbf16>, vector<32x256xbf16>, vector<256x256xf32> -> vector<256x256xf32>
    %cst_7 = arith.constant dense<0xFF800000> : vector<256xf32>
    %12 = vector.multi_reduction <maximumf>, %11, %cst_7 [1] : vector<256x256xf32> to vector<256xf32>
    %13 = vector.shape_cast %12 : vector<256xf32> to vector<256x1xf32>
    %14 = vector.broadcast %13 : vector<256x1xf32> to vector<256x256xf32>
    %15 = arith.subf %11, %14 : vector<256x256xf32>
    %16 = math.exp %15 : vector<256x256xf32>
    %cst_8 = arith.constant dense<0.000000e+00> : vector<256xf32>
    %17 = vector.multi_reduction <add>, %16, %cst_8 [1] : vector<256x256xf32> to vector<256xf32>
    %18 = vector.shape_cast %17 : vector<256xf32> to vector<256x1xf32>
    %19 = tpu.reciprocal %18 {approx = true} : vector<256x1xf32> -> vector<256x1xf32>
    %20 = vector.broadcast %19 : vector<256x1xf32> to vector<256x256xf32>
    %21 = arith.mulf %16, %20 : vector<256x256xf32>
    %22 = arith.truncf %21 : vector<256x256xf32> to vector<256x256xbf16>
    %23 = tpu.iota {dimensions = array<i32: 0>} : vector<8x256xi32>
    %c0_i32 = arith.constant 0 : i32
    %24 = vector.broadcast %c0_i32 : i32 to vector<8x256xi32>
    %25 = arith.cmpi eq, %23, %24 : vector<8x256xi32>
    %26 = arith.extui %25 : vector<8x256xi1> to vector<8x256xi32>
    %27 = arith.sitofp %26 : vector<8x256xi32> to vector<8x256xf32>
    %28 = tpu.concatenate %9, %27 in 0 : vector<32x256xf32>, vector<8x256xf32> -> vector<40x256xf32>
    %29 = arith.truncf %28 : vector<40x256xf32> to vector<40x256xbf16>
    %cst_9 = arith.constant dense<0.000000e+00> : vector<40x256xf32>
    %30 = tpu.matmul %29, %22, %cst_9 {dimension_numbers = #tpu.dot_dimension_numbers<[1], [0], [0], [1], [0, 0, 1, 1], [], []>} : vector<40x256xbf16>, vector<256x256xbf16>, vector<40x256xf32> -> vector<40x256xf32>
    %31 = vector.extract_strided_slice %30 {offsets = [32, 0], sizes = [1, 256], strides = [1, 1]} : vector<40x256xf32> to vector<1x256xf32>
    %32 = vector.extract_strided_slice %30 {offsets = [0, 0], sizes = [32, 256], strides = [1, 1]} : vector<40x256xf32> to vector<32x256xf32>
    %cst_10 = arith.constant 9.99999971E-10 : f32
    %33 = vector.broadcast %cst_10 : f32 to vector<1x256xf32>
    %34 = arith.addf %31, %33 : vector<1x256xf32>
    %cst_11 = arith.constant 1.000000e+00 : f32
    %35 = vector.broadcast %cst_11 : f32 to vector<1x256xf32>
    %36 = arith.divf %35, %34 : vector<1x256xf32>
    %37 = vector.broadcast %36 : vector<1x256xf32> to vector<32x256xf32>
    %38 = arith.mulf %32, %37 : vector<32x256xf32>
    %39 = arith.subf %1, %38 : vector<32x256xf32>
    %40 = arith.truncf %39 : vector<32x256xf32> to vector<32x256xbf16>
    %c0_12 = arith.constant 0 : index
    %c0_13 = arith.constant 0 : index
    %41 = vector.load %arg4[%c0_12, %c0_13] : memref<32x32xbf16, #tpu.memory_space<vmem>>, vector<32x32xbf16>
    %cst_14 = arith.constant dense<0.000000e+00> : vector<32x256xf32>
    %42 = tpu.matmul %41, %40, %cst_14 {dimension_numbers = #tpu.dot_dimension_numbers<[1], [0], [0], [1], [0, 0, 1, 1], [], []>} : vector<32x32xbf16>, vector<32x256xbf16>, vector<32x256xf32> -> vector<32x256xf32>
    %c0_15 = arith.constant 0 : index
    %c0_16 = arith.constant 0 : index
    %43 = vector.load %arg5[%c0_15, %c0_16] : memref<32x1xf32, #tpu.memory_space<vmem>>, vector<32x1xf32>
    %44 = vector.broadcast %43 : vector<32x1xf32> to vector<32x256xf32>
    %45 = arith.addf %42, %44 : vector<32x256xf32>
    %46 = arith.truncf %45 : vector<32x256xf32> to vector<32x256xbf16>
    %c0_17 = arith.constant 0 : index
    %c0_18 = arith.constant 0 : index
    %c0_19 = arith.constant 0 : index
    %47 = vector.load %arg6[%c0_17, %c0_18, %c0_19] : memref<1x32x256xbf16, #tpu.memory_space<vmem>>, vector<1x32x256xbf16>
    %48 = vector.shape_cast %47 : vector<1x32x256xbf16> to vector<32x256xbf16>
    %49 = vector.shape_cast %46 : vector<32x256xbf16> to vector<1x32x256xbf16>
    tpu.vector_store %arg6[%c0_17, %c0_18, %c0_19], %49 {strides = array<i32>} : memref<1x32x256xbf16, #tpu.memory_space<vmem>>, vector<1x32x256xbf16>,
    %cst_20 = arith.constant dense<0.000000e+00> : vector<32xf32>
    %50 = vector.multi_reduction <add>, %45, %cst_20 [1] : vector<32x256xf32> to vector<32xf32>
    %51 = vector.shape_cast %50 : vector<32xf32> to vector<32x1xf32>
    %c0_21 = arith.constant 0 : index
    %c0_22 = arith.constant 0 : index
    %c0_23 = arith.constant 0 : index
    %52 = vector.load %arg7[%c0_21, %c0_22, %c0_23] : memref<1x32x1xf32, #tpu.memory_space<vmem>>, vector<1x32x1xf32>
    %53 = vector.shape_cast %52 : vector<1x32x1xf32> to vector<32x1xf32>
    %54 = vector.shape_cast %51 : vector<32x1xf32> to vector<1x32x1xf32>
    tpu.vector_store %arg7[%c0_21, %c0_22, %c0_23], %54 {strides = array<i32>} : memref<1x32x1xf32, #tpu.memory_space<vmem>>, vector<1x32x1xf32>,
    %55 = arith.mulf %45, %45 : vector<32x256xf32>
    %cst_24 = arith.constant dense<0.000000e+00> : vector<32xf32>
    %56 = vector.multi_reduction <add>, %55, %cst_24 [1] : vector<32x256xf32> to vector<32xf32>
    %57 = vector.shape_cast %56 : vector<32xf32> to vector<32x1xf32>
    %c0_25 = arith.constant 0 : index
    %c0_26 = arith.constant 0 : index
    %c0_27 = arith.constant 0 : index
    %58 = vector.load %arg8[%c0_25, %c0_26, %c0_27] : memref<1x32x1xf32, #tpu.memory_space<vmem>>, vector<1x32x1xf32>
    %59 = vector.shape_cast %58 : vector<1x32x1xf32> to vector<32x1xf32>
    %60 = vector.shape_cast %57 : vector<32x1xf32> to vector<1x32x1xf32>
    tpu.vector_store %arg8[%c0_25, %c0_26, %c0_27], %60 {strides = array<i32>} : memref<1x32x1xf32, #tpu.memory_space<vmem>>, vector<1x32x1xf32>,
    return
  }
  func.func @transform_0(%arg0: i32) -> (i32, i32, i32) {
    %c0_i32 = arith.constant 0 : i32
    %c0_i32_0 = arith.constant 0 : i32
    %c0_i32_1 = arith.constant 0 : i32
    return %arg0, %c0_i32, %c0_i32_0 : i32, i32, i32
  }
  func.func @transform_1(%arg0: i32) -> (i32, i32) {
    %c0_i32 = arith.constant 0 : i32
    %c0_i32_0 = arith.constant 0 : i32
    %c0_i32_1 = arith.constant 0 : i32
    return %c0_i32, %c0_i32_0 : i32, i32
  }
  func.func @transform_2(%arg0: i32) -> (i32, i32) {
    %c0_i32 = arith.constant 0 : i32
    %c0_i32_0 = arith.constant 0 : i32
    %c0_i32_1 = arith.constant 0 : i32
    return %c0_i32, %c0_i32_0 : i32, i32
  }
  func.func @transform_3(%arg0: i32) -> (i32, i32) {
    %c0_i32 = arith.constant 0 : i32
    %c0_i32_0 = arith.constant 0 : i32
    %c0_i32_1 = arith.constant 0 : i32
    return %c0_i32, %c0_i32_0 : i32, i32
  }
  func.func @transform_4(%arg0: i32) -> (i32, i32) {
    %c0_i32 = arith.constant 0 : i32
    %c0_i32_0 = arith.constant 0 : i32
    %c0_i32_1 = arith.constant 0 : i32
    return %c0_i32, %c0_i32_0 : i32, i32
  }
  func.func @transform_5(%arg0: i32) -> (i32, i32, i32) {
    %c0_i32 = arith.constant 0 : i32
    %c0_i32_0 = arith.constant 0 : i32
    %c0_i32_1 = arith.constant 0 : i32
    return %arg0, %c0_i32, %c0_i32_0 : i32, i32, i32
  }
  func.func @transform_6(%arg0: i32) -> (i32, i32, i32) {
    %c0_i32 = arith.constant 0 : i32
    %c0_i32_0 = arith.constant 0 : i32
    %c0_i32_1 = arith.constant 0 : i32
    return %arg0, %c0_i32, %c0_i32_0 : i32, i32, i32
  }
  func.func @transform_7(%arg0: i32) -> (i32, i32, i32) {
    %c0_i32 = arith.constant 0 : i32
    %c0_i32_0 = arith.constant 0 : i32
    %c0_i32_1 = arith.constant 0 : i32
    return %arg0, %c0_i32, %c0_i32_0 : i32, i32, i32
  }
}

module attributes {stable_mosaic.version = 11 : i64} {
  func.func @_bn_relu_residual_kernel(%arg0: i32, %arg1: memref<2x32x256xf32, #tpu.memory_space<vmem>>, %arg2: memref<2x32x256xbf16, #tpu.memory_space<vmem>>, %arg3: memref<1x32x1xf32, #tpu.memory_space<vmem>>, %arg4: memref<1x32x1xf32, #tpu.memory_space<vmem>>, %arg5: memref<2x32x256xf32, #tpu.memory_space<vmem>>) attributes {dimension_semantics = [#tpu.dimension_semantics<parallel>], iteration_bounds = array<i64: 1>, scalar_prefetch = 0 : i64, scratch_operands = 0 : i64, tpu.core_type = #tpu.core_type<tc>, window_params = [{transform_indices = @transform_0, window_bounds = array<i64: 2, 32, 256>}, {transform_indices = @transform_1, window_bounds = array<i64: 2, 32, 256>}, {pipeline_mode = #tpu.pipeline_mode<synchronous>, transform_indices = @transform_2, window_bounds = array<i64: 1, 32, 1>}, {pipeline_mode = #tpu.pipeline_mode<synchronous>, transform_indices = @transform_3, window_bounds = array<i64: 1, 32, 1>}, {transform_indices = @transform_4, window_bounds = array<i64: 2, 32, 256>}]} {
    %c0 = arith.constant 0 : index
    %c0_0 = arith.constant 0 : index
    %c0_1 = arith.constant 0 : index
    %0 = vector.load %arg3[%c0, %c0_0, %c0_1] : memref<1x32x1xf32, #tpu.memory_space<vmem>>, vector<1x32x1xf32>
    %c0_2 = arith.constant 0 : index
    %c0_3 = arith.constant 0 : index
    %c0_4 = arith.constant 0 : index
    %1 = vector.load %arg2[%c0_2, %c0_3, %c0_4] : memref<2x32x256xbf16, #tpu.memory_space<vmem>>, vector<2x32x256xbf16>
    %2 = arith.extf %1 : vector<2x32x256xbf16> to vector<2x32x256xf32>
    %3 = vector.broadcast %0 : vector<1x32x1xf32> to vector<2x32x256xf32>
    %4 = arith.mulf %3, %2 : vector<2x32x256xf32>
    %c0_5 = arith.constant 0 : index
    %c0_6 = arith.constant 0 : index
    %c0_7 = arith.constant 0 : index
    %5 = vector.load %arg4[%c0_5, %c0_6, %c0_7] : memref<1x32x1xf32, #tpu.memory_space<vmem>>, vector<1x32x1xf32>
    %6 = vector.broadcast %5 : vector<1x32x1xf32> to vector<2x32x256xf32>
    %7 = arith.addf %4, %6 : vector<2x32x256xf32>
    %c0_8 = arith.constant 0 : index
    %c0_9 = arith.constant 0 : index
    %c0_10 = arith.constant 0 : index
    %8 = vector.load %arg1[%c0_8, %c0_9, %c0_10] : memref<2x32x256xf32, #tpu.memory_space<vmem>>, vector<2x32x256xf32>
    %cst = arith.constant 0.000000e+00 : f32
    %9 = vector.broadcast %cst : f32 to vector<2x32x256xf32>
    %10 = arith.maximumf %7, %9 : vector<2x32x256xf32>
    %11 = arith.addf %8, %10 : vector<2x32x256xf32>
    %c0_11 = arith.constant 0 : index
    %c0_12 = arith.constant 0 : index
    %c0_13 = arith.constant 0 : index
    %12 = vector.load %arg5[%c0_11, %c0_12, %c0_13] : memref<2x32x256xf32, #tpu.memory_space<vmem>>, vector<2x32x256xf32>
    tpu.vector_store %arg5[%c0_11, %c0_12, %c0_13], %11 {strides = array<i32>} : memref<2x32x256xf32, #tpu.memory_space<vmem>>, vector<2x32x256xf32>,
    return
  }
  func.func @transform_0(%arg0: i32) -> (i32, i32, i32) {
    %c0_i32 = arith.constant 0 : i32
    %c0_i32_0 = arith.constant 0 : i32
    %c0_i32_1 = arith.constant 0 : i32
    return %arg0, %c0_i32, %c0_i32_0 : i32, i32, i32
  }
  func.func @transform_1(%arg0: i32) -> (i32, i32, i32) {
    %c0_i32 = arith.constant 0 : i32
    %c0_i32_0 = arith.constant 0 : i32
    %c0_i32_1 = arith.constant 0 : i32
    return %arg0, %c0_i32, %c0_i32_0 : i32, i32, i32
  }
  func.func @transform_2(%arg0: i32) -> (i32, i32, i32) {
    %c0_i32 = arith.constant 0 : i32
    %c0_i32_0 = arith.constant 0 : i32
    %c0_i32_1 = arith.constant 0 : i32
    %c0_i32_2 = arith.constant 0 : i32
    return %c0_i32, %c0_i32_0, %c0_i32_1 : i32, i32, i32
  }
  func.func @transform_3(%arg0: i32) -> (i32, i32, i32) {
    %c0_i32 = arith.constant 0 : i32
    %c0_i32_0 = arith.constant 0 : i32
    %c0_i32_1 = arith.constant 0 : i32
    %c0_i32_2 = arith.constant 0 : i32
    return %c0_i32, %c0_i32_0, %c0_i32_1 : i32, i32, i32
  }
  func.func @transform_4(%arg0: i32) -> (i32, i32, i32) {
    %c0_i32 = arith.constant 0 : i32
    %c0_i32_0 = arith.constant 0 : i32
    %c0_i32_1 = arith.constant 0 : i32
    return %arg0, %c0_i32, %c0_i32_0 : i32, i32, i32
  }
}

</mosaic_0001>

<llo_original>
// kernel: sa_layer.3
$region0: #{sa_layer.3}
  #allocation0 [shape = 'u32[]', space=smem, size = 0x4, offset = 0x4, fixed_abs, tag = 'smem constant byte address 0x4 - core index']
  #allocation1 [shape = 'u32[144,128]{1,0:T(1,128)}', space=vmem, size = 0x12000, scoped, tag = 'internal scratch']
  %s0 = inlined_call_operand.vmem [shape: f32[2,32,256], index: 0, kind: input, shape index: {}]
  %s1 = inlined_call_operand.vmem [shape: bf16[2,32,256], index: 1, kind: input, shape index: {}]
  %s2 = inlined_call_operand.vmem [shape: f32[1,32,1], index: 2, kind: input, shape index: {}]
  %s3 = inlined_call_operand.vmem [shape: f32[1,32,1], index: 3, kind: input, shape index: {}]
  %s4 = inlined_call_operand.hbm [shape: f32[2,32,256], index: 4, kind: output, shape index: {}]
  %s5 = sld [smem:[#allocation0]]
  $region26: #{sa_layer.3} parent=0
    _
  %s7 = ssub.s32 1, %s5
  %s8 = scalar_select 0, %s7, %s5
  $region1: #{sa_layer.3} parent=0
    #allocation2 [shape = 'u8[65536]{0}', space=vmem, size = 0x10000, scoped, tag = 'output window, operand 0, single buffered']
    #allocation3 [shape = 's32[1]{0}', space=sflag, size = 0x4, scoped, tag = 'scoped memory for sa_layer.3']
    %9 = vsyncpa [#allocation3], 0
    // Predicated region
    $region2: #{sa_layer.3} parent=1 // pred_check
      _
    $region3: #{sa_layer.3} parent=1 // pred_check_branch
      %11 = sbr.rel (0) target = $region5
    $region4: #{sa_layer.3} parent=1 // pred_region
      _
    $region5: #{sa_layer.3} parent=1 // pred_fallthru
      _
    // Predicated region
    $region6: #{sa_layer.3} parent=1 // pred_check
      _
    $region7: #{sa_layer.3} parent=1 // pred_check_branch
      %13 = sbr.rel (0) target = $region9
    $region8: #{sa_layer.3} parent=1 // pred_region
      _
    $region9: #{sa_layer.3} parent=1 // pred_fallthru
      _
    // Predicated region
    $region10: #{sa_layer.3} parent=1 // pred_check
      _
    $region11: #{sa_layer.3} parent=1 // pred_check_branch
      %15 = sbr.rel (0) target = $region13
    $region12: #{sa_layer.3} parent=1 // pred_region
      _
    $region13: #{sa_layer.3} parent=1 // pred_fallthru
      _
    // Predicated region
    $region14: #{sa_layer.3} parent=1 // pred_check
      _
    $region15: #{sa_layer.3} parent=1 // pred_check_branch
      %17 = sbr.rel (0) target = $region17
    $region16: #{sa_layer.3} parent=1 // pred_region
      _
    $region17: #{sa_layer.3} parent=1 // pred_fallthru
      _
    %v18 = vld [vmem:[%s2] sm:$0xff]
    %v19 = vld [vmem:[%s2 + $0x8] sm:$0xff]
    %v20 = vld [vmem:[%s2 + $0x10] sm:$0xff]
    %v21 = vld [vmem:[%s2 + $0x18] sm:$0xff]
    %v22 = vld [vmem:[%s1] sm:$0xff]
    %v23 = vld [vmem:[%s1 + $0x8] sm:$0xff]
    %v24 = vld [vmem:[%s1 + $0x10] sm:$0xff]
    %v25 = vld [vmem:[%s1 + $0x18] sm:$0xff]
    %v26 = vld [vmem:[%s1 + $0x20] sm:$0xff]
    %v27 = vld [vmem:[%s1 + $0x28] sm:$0xff]
    %v28 = vld [vmem:[%s1 + $0x30] sm:$0xff]
    %v29 = vld [vmem:[%s1 + $0x38] sm:$0xff]
    %v30 = vunpack.c.l.bf16 %v22
    %v31 = vunpack.c.h.bf16 %v22
    %v32 = vunpack.c.l.bf16 %v23
    %v33 = vunpack.c.h.bf16 %v23
    %v34 = vunpack.c.l.bf16 %v24
    %v35 = vunpack.c.h.bf16 %v24
    %v36 = vunpack.c.l.bf16 %v25
    %v37 = vunpack.c.h.bf16 %v25
    %v38 = vunpack.c.l.bf16 %v26
    %v39 = vunpack.c.h.bf16 %v26
    %v40 = vunpack.c.l.bf16 %v27
    %v41 = vunpack.c.h.bf16 %v27
    %v42 = vunpack.c.l.bf16 %v28
    %v43 = vunpack.c.h.bf16 %v28
    %v44 = vunpack.c.l.bf16 %v29
    %v45 = vunpack.c.h.bf16 %v29
    %47 = vset.pattern.permute.xlu0 0
    %48 = vperm.xlu0 %47, %v18
    %v49 = vpop.permute.xlu0 %48
    %52 = vset.pattern.permute.xlu0 0
    %53 = vperm.xlu0 %52, %v19
    %v54 = vpop.permute.xlu0 %53
    %57 = vset.pattern.permute.xlu0 0
    %58 = vperm.xlu0 %57, %v20
    %v59 = vpop.permute.xlu0 %58
    %62 = vset.pattern.permute.xlu0 0
    %63 = vperm.xlu0 %62, %v21
    %v64 = vpop.permute.xlu0 %63
    %v66 = vmul.f32 %v49, %v30
    %v67 = vmul.f32 %v49, %v31
    %v68 = vmul.f32 %v54, %v32
    %v69 = vmul.f32 %v54, %v33
    %v70 = vmul.f32 %v59, %v34
    %v71 = vmul.f32 %v59, %v35
    %v72 = vmul.f32 %v64, %v36
    %v73 = vmul.f32 %v64, %v37
    %v74 = vmul.f32 %v49, %v38
    %v75 = vmul.f32 %v49, %v39
    %v76 = vmul.f32 %v54, %v40
    %v77 = vmul.f32 %v54, %v41
    %v78 = vmul.f32 %v59, %v42
    %v79 = vmul.f32 %v59, %v43
    %v80 = vmul.f32 %v64, %v44
    %v81 = vmul.f32 %v64, %v45
    %v82 = vld [vmem:[%s3] sm:$0xff]
    %v83 = vld [vmem:[%s3 + $0x8] sm:$0xff]
    %v84 = vld [vmem:[%s3 + $0x10] sm:$0xff]
    %v85 = vld [vmem:[%s3 + $0x18] sm:$0xff]
    %87 = vset.pattern.permute.xlu0 0
    %88 = vperm.xlu0 %87, %v82
    %v89 = vpop.permute.xlu0 %88
    %92 = vset.pattern.permute.xlu0 0
    %93 = vperm.xlu0 %92, %v83
    %v94 = vpop.permute.xlu0 %93
    %97 = vset.pattern.permute.xlu0 0
    %98 = vperm.xlu0 %97, %v84
    %v99 = vpop.permute.xlu0 %98
    %102 = vset.pattern.permute.xlu0 0
    %103 = vperm.xlu0 %102, %v85
    %v104 = vpop.permute.xlu0 %103
    %v106 = vadd.f32 %v66, %v89
    %v107 = vadd.f32 %v67, %v89
    %v108 = vadd.f32 %v68, %v94
    %v109 = vadd.f32 %v69, %v94
    %v110 = vadd.f32 %v70, %v99
    %v111 = vadd.f32 %v71, %v99
    %v112 = vadd.f32 %v72, %v104
    %v113 = vadd.f32 %v73, %v104
    %v114 = vadd.f32 %v74, %v89
    %v115 = vadd.f32 %v75, %v89
    %v116 = vadd.f32 %v76, %v94
    %v117 = vadd.f32 %v77, %v94
    %v118 = vadd.f32 %v78, %v99
    %v119 = vadd.f32 %v79, %v99
    %v120 = vadd.f32 %v80, %v104
    %v121 = vadd.f32 %v81, %v104
    %v122 = vld [vmem:[%s0] sm:$0xff]
    %v123 = vld [vmem:[%s0 + $0x8] sm:$0xff]
    %v124 = vld [vmem:[%s0 + $0x10] sm:$0xff]
    %v125 = vld [vmem:[%s0 + $0x18] sm:$0xff]
    %v126 = vld [vmem:[%s0 + $0x20] sm:$0xff]
    %v127 = vld [vmem:[%s0 + $0x28] sm:$0xff]
    %v128 = vld [vmem:[%s0 + $0x30] sm:$0xff]
    %v129 = vld [vmem:[%s0 + $0x38] sm:$0xff]
    %v130 = vld [vmem:[%s0 + $0x40] sm:$0xff]
    %v131 = vld [vmem:[%s0 + $0x48] sm:$0xff]
    %v132 = vld [vmem:[%s0 + $0x50] sm:$0xff]
    %v133 = vld [vmem:[%s0 + $0x58] sm:$0xff]
    %v134 = vld [vmem:[%s0 + $0x60] sm:$0xff]
    %v135 = vld [vmem:[%s0 + $0x68] sm:$0xff]
    %v136 = vld [vmem:[%s0 + $0x70] sm:$0xff]
    %v137 = vld [vmem:[%s0 + $0x78] sm:$0xff]
    %v138 = vmax.f32 %v106, 0.0
    %v139 = vmax.f32 %v107, 0.0
    %v140 = vmax.f32 %v108, 0.0
    %v141 = vmax.f32 %v109, 0.0
    %v142 = vmax.f32 %v110, 0.0
    %v143 = vmax.f32 %v111, 0.0
    %v144 = vmax.f32 %v112, 0.0
    %v145 = vmax.f32 %v113, 0.0
    %v146 = vmax.f32 %v114, 0.0
    %v147 = vmax.f32 %v115, 0.0
    %v148 = vmax.f32 %v116, 0.0
    %v149 = vmax.f32 %v117, 0.0
    %v150 = vmax.f32 %v118, 0.0
    %v151 = vmax.f32 %v119, 0.0
    %v152 = vmax.f32 %v120, 0.0
    %v153 = vmax.f32 %v121, 0.0
    %v154 = vadd.f32 %v122, %v138
    %v155 = vadd.f32 %v123, %v139
    %v156 = vadd.f32 %v124, %v140
    %v157 = vadd.f32 %v125, %v141
    %v158 = vadd.f32 %v126, %v142
    %v159 = vadd.f32 %v127, %v143
    %v160 = vadd.f32 %v128, %v144
    %v161 = vadd.f32 %v129, %v145
    %v162 = vadd.f32 %v130, %v146
    %v163 = vadd.f32 %v131, %v147
    %v164 = vadd.f32 %v132, %v148
    %v165 = vadd.f32 %v133, %v149
    %v166 = vadd.f32 %v134, %v150
    %v167 = vadd.f32 %v135, %v151
    %v168 = vadd.f32 %v136, %v152
    %v169 = vadd.f32 %v137, %v153
    %170 = vst [vmem:[#allocation2] sm:$0xff] %v154
    %171 = vst [vmem:[#allocation2 + $0x8] sm:$0xff] %v155
    %172 = vst [vmem:[#allocation2 + $0x10] sm:$0xff] %v156
    %173 = vst [vmem:[#allocation2 + $0x18] sm:$0xff] %v157
    %174 = vst [vmem:[#allocation2 + $0x20] sm:$0xff] %v158
    %175 = vst [vmem:[#allocation2 + $0x28] sm:$0xff] %v159
    %176 = vst [vmem:[#allocation2 + $0x30] sm:$0xff] %v160
    %177 = vst [vmem:[#allocation2 + $0x38] sm:$0xff] %v161
    %178 = vst [vmem:[#allocation2 + $0x40] sm:$0xff] %v162
    %179 = vst [vmem:[#allocation2 + $0x48] sm:$0xff] %v163
    %180 = vst [vmem:[#allocation2 + $0x50] sm:$0xff] %v164
    %181 = vst [vmem:[#allocation2 + $0x58] sm:$0xff] %v165
    %182 = vst [vmem:[#allocation2 + $0x60] sm:$0xff] %v166
    %183 = vst [vmem:[#allocation2 + $0x68] sm:$0xff] %v167
    %184 = vst [vmem:[#allocation2 + $0x70] sm:$0xff] %v168
    %185 = vst [vmem:[#allocation2 + $0x78] sm:$0xff] %v169
    // Predicated region
    $region18: #{sa_layer.3} parent=1 // pred_check
      _
    $region19: #{sa_layer.3} parent=1 // pred_check_branch
      %187 = sbr.rel (0) target = $region21
    $region20: #{sa_layer.3} parent=1 // pred_region
      %s189 = ssub.s32 2048, 2048
      %190 = vsyncadd [#allocation3], %s189
      %s191 = sshll.u32 [#allocation2], 4
      %s192 = int_to_ptr.vmem [resolvable:$true] %s191
      %197 = dma.vmem_to_hbm [thread:$0]  %s192, 2048, %s4, [#allocation3], 256, 256, 16
    $region21: #{sa_layer.3} parent=1 // pred_fallthru
      _
    // Predicated region
    $region22: #{sa_layer.3} parent=1 // pred_check
      _
    $region23: #{sa_layer.3} parent=1 // pred_check_branch
      %199 = sbr.rel (0) target = $region25
    $region24: #{sa_layer.3} parent=1 // pred_region
      %200 = dma.done [#allocation3], 2048
    $region25: #{sa_layer.3} parent=1 // pred_fallthru
      _
    %201 = vsyncpa [#allocation3], 1

// kernel: sa_layer.2
$region0: #{sa_layer.2}
  #allocation0 [shape = 'u32[]', space=smem, size = 0x4, offset = 0x4, fixed_abs, tag = 'smem constant byte address 0x4 - core index']
  #allocation1 [shape = 'u32[144,128]{1,0:T(1,128)}', space=vmem, size = 0x12000, scoped, tag = 'internal scratch']
  %s0 = inlined_call_operand.vmem [shape: f32[2,32,256], index: 0, kind: input, shape index: {}]
  %s1 = inlined_call_operand.vmem [shape: bf16[64,32], index: 1, kind: input, shape index: {}]
  %s2 = inlined_call_operand.vmem [shape: f32[32,1], index: 2, kind: input, shape index: {}]
  %s3 = inlined_call_operand.vmem [shape: bf16[32,32], index: 3, kind: input, shape index: {}]
  %s4 = inlined_call_operand.vmem [shape: f32[32,1], index: 4, kind: input, shape index: {}]
  %s5 = inlined_call_operand.vmem [shape: bf16[2,32,256], index: 5, kind: output, shape index: {0}]
  %s6 = inlined_call_operand.vmem [shape: f32[2,32,1], index: 6, kind: output, shape index: {1}]
  %s7 = inlined_call_operand.vmem [shape: f32[2,32,1], index: 7, kind: output, shape index: {2}]
  %8 = xla_tuple %s5, %s6, %s7
  %s9 = sld [smem:[#allocation0]]
  $region69: #{sa_layer.2} parent=0
    _
  %s11 = ssub.s32 1, %s9
  %s12 = scalar_select 0, %s11, %s9
  loop: start=0, step=1, limit=4
  $region2: #{sa_layer.2} parent=0 // loop_pre_header
    _
  $region3: #{sa_layer.2} parent=0 // loop_header
    %s14 = sphi 0, %s18
    %p15 = scmp.ge.s32.totalorder %s14, 4
    %s24 = sphi 0, %s26
    %s27 = sphi 0, %s24
    %s28 = sphi 0, %s27
    %s44 = sphi 0, %s28
    %s48 = sphi 0, %s48
    %s50 = sphi 0, %s48
    %s51 = sphi 0, %s50
    %s65 = sphi 0, %s51
    %s69 = sphi 0, %s69
    %s71 = sphi 0, %s69
    %s72 = sphi 0, %s71
    %s86 = sphi 0, %s72
    %s90 = sphi 0, %s90
    %s92 = sphi 0, %s90
    %s93 = sphi 0, %s92
    %s107 = sphi 0, %s93
    %s111 = sphi 0, %s111
    %s113 = sphi 0, %s111
    %s114 = sphi 0, %s113
    %s128 = sphi 0, %s114
    %s134 = sphi 0, %s136
    %s137 = sphi 0, %s134
    %s138 = sphi 0, %s137
    %s154 = sphi 0, %s138
    %s160 = sphi 0, %s162
    %s163 = sphi 0, %s160
    %s164 = sphi 0, %s163
    %s180 = sphi 0, %s164
    %s186 = sphi 0, %s188
    %s189 = sphi 0, %s186
    %s190 = sphi 0, %s189
    %s206 = sphi 0, %s190
  $region4: #{sa_layer.2} parent=0 // loop_header_branch
    %17 = sbr.rel (%p15) target = $region8
  $region5: #{sa_layer.2} parent=0 // loop_body
    %s19 = ssub.s32 %s14, 1
    %s20 = ssub.s32 %s14, 2
    %s21 = sadd.s32 %s14, 1
    %s22 = ssub.s32 %s14, %s21
    %p23 = scmp.eq.s32.totalorder %s22, 0
    %s25 = sadd.s32 %s24, 1
    %s26 = scalar_select %p23, %s24, %s25
    %p29 = pneg %p23
    %p30 = scmp.eq.s32.totalorder %s14, 1
    %p31 = por %p29, %p30
    %p32 = scmp.ne.s32.totalorder %s24, %s27
    %p33 = scmp.eq.s32.totalorder %s14, 0
    %p34 = por %p32, %p33
    %p35 = scmp.ne.s32.totalorder %s24, %s27
    %p36 = scmp.eq.s32.totalorder %s19, 1
    %p37 = por %p35, %p36
    %p38 = scmp.ne.s32.totalorder %s27, %s28
    %p39 = scmp.eq.s32.totalorder %s19, 0
    %p40 = por %p38, %p39
    %p41 = scmp.ne.s32.totalorder %s27, %s28
    %p42 = scmp.eq.s32.totalorder %s20, 1
    %p43 = por %p41, %p42
    %p45 = scmp.ne.s32.totalorder %s28, %s44
    %p46 = scmp.eq.s32.totalorder %s20, 0
    %p47 = por %p45, %p46
    %s49 = sadd.s32 %s48, 1
    %p52 = scmp.eq.s32.totalorder %s14, 1
    %p53 = scmp.ne.s32.totalorder %s48, %s50
    %p54 = scmp.eq.s32.totalorder %s14, 0
    %p55 = por %p53, %p54
    %p56 = scmp.ne.s32.totalorder %s48, %s50
    %p57 = scmp.eq.s32.totalorder %s19, 1
    %p58 = por %p56, %p57
    %p59 = scmp.ne.s32.totalorder %s50, %s51
    %p60 = scmp.eq.s32.totalorder %s19, 0
    %p61 = por %p59, %p60
    %p62 = scmp.ne.s32.totalorder %s50, %s51
    %p63 = scmp.eq.s32.totalorder %s20, 1
    %p64 = por %p62, %p63
    %p66 = scmp.ne.s32.totalorder %s51, %s65
    %p67 = scmp.eq.s32.totalorder %s20, 0
    %p68 = por %p66, %p67
    %s70 = sadd.s32 %s69, 1
    %p73 = scmp.eq.s32.totalorder %s14, 1
    %p74 = scmp.ne.s32.totalorder %s69, %s71
    %p75 = scmp.eq.s32.totalorder %s14, 0
    %p76 = por %p74, %p75
    %p77 = scmp.ne.s32.totalorder %s69, %s71
    %p78 = scmp.eq.s32.totalorder %s19, 1
    %p79 = por %p77, %p78
    %p80 = scmp.ne.s32.totalorder %s71, %s72
    %p81 = scmp.eq.s32.totalorder %s19, 0
    %p82 = por %p80, %p81
    %p83 = scmp.ne.s32.totalorder %s71, %s72
    %p84 = scmp.eq.s32.totalorder %s20, 1
    %p85 = por %p83, %p84
    %p87 = scmp.ne.s32.totalorder %s72, %s86
    %p88 = scmp.eq.s32.totalorder %s20, 0
    %p89 = por %p87, %p88
    %s91 = sadd.s32 %s90, 1
    %p94 = scmp.eq.s32.totalorder %s14, 1
    %p95 = scmp.ne.s32.totalorder %s90, %s92
    %p96 = scmp.eq.s32.totalorder %s14, 0
    %p97 = por %p95, %p96
    %p98 = scmp.ne.s32.totalorder %s90, %s92
    %p99 = scmp.eq.s32.totalorder %s19, 1
    %p100 = por %p98, %p99
    %p101 = scmp.ne.s32.totalorder %s92, %s93
    %p102 = scmp.eq.s32.totalorder %s19, 0
    %p103 = por %p101, %p102
    %p104 = scmp.ne.s32.totalorder %s92, %s93
    %p105 = scmp.eq.s32.totalorder %s20, 1
    %p106 = por %p104, %p105
    %p108 = scmp.ne.s32.totalorder %s93, %s107
    %p109 = scmp.eq.s32.totalorder %s20, 0
    %p110 = por %p108, %p109
    %s112 = sadd.s32 %s111, 1
    %p115 = scmp.eq.s32.totalorder %s14, 1
    %p116 = scmp.ne.s32.totalorder %s111, %s113
    %p117 = scmp.eq.s32.totalorder %s14, 0
    %p118 = por %p116, %p117
    %p119 = scmp.ne.s32.totalorder %s111, %s113
    %p120 = scmp.eq.s32.totalorder %s19, 1
    %p121 = por %p119, %p120
    %p122 = scmp.ne.s32.totalorder %s113, %s114
    %p123 = scmp.eq.s32.totalorder %s19, 0
    %p124 = por %p122, %p123
    %p125 = scmp.ne.s32.totalorder %s113, %s114
    %p126 = scmp.eq.s32.totalorder %s20, 1
    %p127 = por %p125, %p126
    %p129 = scmp.ne.s32.totalorder %s114, %s128
    %p130 = scmp.eq.s32.totalorder %s20, 0
    %p131 = por %p129, %p130
    %s132 = ssub.s32 %s14, %s21
    %p133 = scmp.eq.s32.totalorder %s132, 0
    %s135 = sadd.s32 %s134, 1
    %s136 = scalar_select %p133, %s134, %s135
    %p139 = pneg %p133
    %p140 = scmp.eq.s32.totalorder %s14, 1
    %p141 = por %p139, %p140
    %p142 = scmp.ne.s32.totalorder %s134, %s137
    %p143 = scmp.eq.s32.totalorder %s14, 0
    %p144 = por %p142, %p143
    %p145 = scmp.ne.s32.totalorder %s134, %s137
    %p146 = scmp.eq.s32.totalorder %s19, 1
    %p147 = por %p145, %p146
    %p148 = scmp.ne.s32.totalorder %s137, %s138
    %p149 = scmp.eq.s32.totalorder %s19, 0
    %p150 = por %p148, %p149
    %p151 = scmp.ne.s32.totalorder %s137, %s138
    %p152 = scmp.eq.s32.totalorder %s20, 1
    %p153 = por %p151, %p152
    %p155 = scmp.ne.s32.totalorder %s138, %s154
    %p156 = scmp.eq.s32.totalorder %s20, 0
    %p157 = por %p155, %p156
    %s158 = ssub.s32 %s14, %s21
    %p159 = scmp.eq.s32.totalorder %s158, 0
    %s161 = sadd.s32 %s160, 1
    %s162 = scalar_select %p159, %s160, %s161
    %p165 = pneg %p159
    %p166 = scmp.eq.s32.totalorder %s14, 1
    %p167 = por %p165, %p166
    %p168 = scmp.ne.s32.totalorder %s160, %s163
    %p169 = scmp.eq.s32.totalorder %s14, 0
    %p170 = por %p168, %p169
    %p171 = scmp.ne.s32.totalorder %s160, %s163
    %p172 = scmp.eq.s32.totalorder %s19, 1
    %p173 = por %p171, %p172
    %p174 = scmp.ne.s32.totalorder %s163, %s164
    %p175 = scmp.eq.s32.totalorder %s19, 0
    %p176 = por %p174, %p175
    %p177 = scmp.ne.s32.totalorder %s163, %s164
    %p178 = scmp.eq.s32.totalorder %s20, 1
    %p179 = por %p177, %p178
    %p181 = scmp.ne.s32.totalorder %s164, %s180
    %p182 = scmp.eq.s32.totalorder %s20, 0
    %p183 = por %p181, %p182
    %s184 = ssub.s32 %s14, %s21
    %p185 = scmp.eq.s32.totalorder %s184, 0
    %s187 = sadd.s32 %s186, 1
    %s188 = scalar_select %p185, %s186, %s187
    %p191 = pneg %p185
    %p192 = scmp.eq.s32.totalorder %s14, 1
    %p193 = por %p191, %p192
    %p194 = scmp.ne.s32.totalorder %s186, %s189
    %p195 = scmp.eq.s32.totalorder %s14, 0
    %p196 = por %p194, %p195
    %p197 = scmp.ne.s32.totalorder %s186, %s189
    %p198 = scmp.eq.s32.totalorder %s19, 1
    %p199 = por %p197, %p198
    %p200 = scmp.ne.s32.totalorder %s189, %s190
    %p201 = scmp.eq.s32.totalorder %s19, 0
    %p202 = por %p200, %p201
    %p203 = scmp.ne.s32.totalorder %s189, %s190
    %p204 = scmp.eq.s32.totalorder %s20, 1
    %p205 = por %p203, %p204
    %p207 = scmp.ne.s32.totalorder %s190, %s206
    %p208 = scmp.eq.s32.totalorder %s20, 0
    %p209 = por %p207, %p208
    %p210 = scmp.le.s32.totalorder 1, %s14
    %p211 = scmp.lt.s32.totalorder %s14, 3
    %p212 = pnand %p210, %p211
    %p213 = pneg %p212
    // Predicated region
    $region9: #{sa_layer.2} parent=5 // pred_check
      _
    $region10: #{sa_layer.2} parent=5 // pred_check_branch
      %215 = sbr.rel (%p212) target = $region12
    $region11: #{sa_layer.2} parent=5 // pred_region
      %s216 = ssub.s32 %s14, 1
      // Predicated region
      $region13: #{sa_layer.2} parent=11 // pred_check
        %p217 = pneg %p61
      $region14: #{sa_layer.2} parent=11 // pred_check_branch
        %219 = sbr.rel (%p217) target = $region16
      $region15: #{sa_layer.2} parent=11 // pred_region
        _
      $region16: #{sa_layer.2} parent=11 // pred_fallthru
        _
      // Predicated region
      $region17: #{sa_layer.2} parent=11 // pred_check
        %p220 = pneg %p82
      $region18: #{sa_layer.2} parent=11 // pred_check_branch
        %222 = sbr.rel (%p220) target = $region20
      $region19: #{sa_layer.2} parent=11 // pred_region
        _
      $region20: #{sa_layer.2} parent=11 // pred_fallthru
        _
      // Predicated region
      $region21: #{sa_layer.2} parent=11 // pred_check
        %p223 = pneg %p103
      $region22: #{sa_layer.2} parent=11 // pred_check_branch
        %225 = sbr.rel (%p223) target = $region24
      $region23: #{sa_layer.2} parent=11 // pred_region
        _
      $region24: #{sa_layer.2} parent=11 // pred_fallthru
        _
      // Predicated region
      $region25: #{sa_layer.2} parent=11 // pred_check
        %p226 = pneg %p124
      $region26: #{sa_layer.2} parent=11 // pred_check_branch
        %228 = sbr.rel (%p226) target = $region28
      $region27: #{sa_layer.2} parent=11 // pred_region
        _
      $region28: #{sa_layer.2} parent=11 // pred_fallthru
        _
    $region12: #{sa_layer.2} parent=5 // pred_fallthru
      _
    %p229 = scmp.lt.s32.totalorder %s14, 2
    // Predicated region
    $region29: #{sa_layer.2} parent=5 // pred_check
      %p230 = pneg %p229
    $region30: #{sa_layer.2} parent=5 // pred_check_branch
      %232 = sbr.rel (%p230) target = $region32
    $region31: #{sa_layer.2} parent=5 // pred_region
      // Predicated region
      $region33: #{sa_layer.2} parent=31 // pred_check
        %p233 = pneg %p34
      $region34: #{sa_layer.2} parent=31 // pred_check_branch
        %235 = sbr.rel (%p233) target = $region36
      $region35: #{sa_layer.2} parent=31 // pred_region
        %p236 = scmp.lt.s32.totalorder %s14, 1
        %s237 = scalar_select %p236, %s14, 1
        %s238 = smul.addr %s237, 8
        %s239 = smul.addr %s238, 8
        %s240 = scalar_lea.vmem %s0, %s239
      $region36: #{sa_layer.2} parent=31 // pred_fallthru
        _
    $region32: #{sa_layer.2} parent=5 // pred_fallthru
      _
    %p241 = scmp.le.s32.totalorder 1, %s14
    %p242 = scmp.lt.s32.totalorder %s14, 3
    %p243 = pnand %p241, %p242
    %p244 = pneg %p243
    // Predicated region
    $region37: #{sa_layer.2} parent=5 // pred_check
      _
    $region38: #{sa_layer.2} parent=5 // pred_check_branch
      %246 = sbr.rel (%p243) target = $region40
    $region39: #{sa_layer.2} parent=5 // pred_region
      %s247 = ssub.s32 %s14, 1
      %p248 = scmp.lt.s32.totalorder %s19, 1
      %s249 = scalar_select %p248, %s19, 1
      %s250 = smul.addr %s249, 8
      %s251 = smul.addr %s250, 8
      %s252 = scalar_lea.vmem %s0, %s251
      %p253 = pneg %p40
      %p254 = pneg %p37
      %p255 = pneg %p61
      %p256 = pneg %p58
      %p257 = pneg %p82
      %p258 = pneg %p79
      %p259 = pneg %p103
      %p260 = pneg %p100
      %p261 = pneg %p124
      %p262 = pneg %p121
      %p263 = pneg %p150
      %p264 = pneg %p147
      %p265 = scmp.lt.s32.totalorder %s19, 1
      %s266 = scalar_select %p265, %s19, 1
      %s267 = smul.addr %s266, 8
      %s268 = smul.addr %s267, 4
      %s269 = scalar_lea.vmem %s5, %s268
      %p270 = pneg %p176
      %p271 = pneg %p173
      %p272 = scmp.lt.s32.totalorder %s19, 1
      %s273 = scalar_select %p272, %s19, 1
      %s274 = smul.addr %s273, 4
      %s275 = smul.addr %s274, 8
      %s276 = scalar_lea.vmem %s6, %s275
      %p277 = pneg %p202
      %p278 = pneg %p199
      %p279 = scmp.lt.s32.totalorder %s19, 1
      %s280 = scalar_select %p279, %s19, 1
      %s281 = smul.addr %s280, 4
      %s282 = smul.addr %s281, 8
      %s283 = scalar_lea.vmem %s7, %s282
      %p284 = scmp.lt.s32.totalorder %s19, 1
      %s285 = scalar_select %p284, %s19, 1
      %s286 = smul.addr %s285, 8
      %s287 = smul.addr %s286, 8
      %s288 = scalar_lea.vmem %s0, %s287
      %p289 = scmp.lt.s32.totalorder %s19, 1
      %s290 = scalar_select %p289, %s19, 1
      %s291 = smul.addr %s290, 8
      %s292 = smul.addr %s291, 4
      %s293 = scalar_lea.vmem %s5, %s292
      %p294 = scmp.lt.s32.totalorder %s19, 1
      %s295 = scalar_select %p294, %s19, 1
      %s296 = smul.addr %s295, 4
      %s297 = smul.addr %s296, 8
      %s298 = scalar_lea.vmem %s6, %s297
      %p299 = scmp.lt.s32.totalorder %s19, 1
      %s300 = scalar_select %p299, %s19, 1
      %s301 = smul.addr %s300, 4
      %s302 = smul.addr %s301, 8
      %s303 = scalar_lea.vmem %s7, %s302
      %v305 = vld [vmem:[%s288] sm:$0xff]
      %v306 = vld [vmem:[%s288 + $0x8] sm:$0xff]
      %v307 = vld [vmem:[%s288 + $0x10] sm:$0xff]
      %v308 = vld [vmem:[%s288 + $0x18] sm:$0xff]
      %v309 = vld [vmem:[%s288 + $0x20] sm:$0xff]
      %v310 = vld [vmem:[%s288 + $0x28] sm:$0xff]
      %v311 = vld [vmem:[%s288 + $0x30] sm:$0xff]
      %v312 = vld [vmem:[%s288 + $0x38] sm:$0xff]
      %v313 = vpack.c.bf16 %v307, %v305
      %v314 = vpack.c.bf16 %v308, %v306
      %v315 = vpack.c.bf16 %v311, %v309
      %v316 = vpack.c.bf16 %v312, %v310
      %v317 = vld [vmem:[%s1] sm:$0xf]
      %v318 = vld [vmem:[%s1 + $0x4] sm:$0xf]
      %v319 = vld [vmem:[%s1 + $0x8] sm:$0xf]
      %v320 = vld [vmem:[%s1 + $0xc] sm:$0xf]
      %v321 = vld [vmem:[%s1 + $0x10] sm:$0xf]
      %v322 = vld [vmem:[%s1 + $0x14] sm:$0xf]
      %v323 = vld [vmem:[%s1 + $0x18] sm:$0xf]
      %v324 = vld [vmem:[%s1 + $0x1c] sm:$0xf]
      %v333 = vunpack.c.l.b16 %v317
      %v334 = vunpack.c.l.b16 %v318
      %v335 = vunpack.c.l.b16 %v319
      %v336 = vunpack.c.l.b16 %v320
      %v337 = vunpack.c.l.b16 %v321
      %v338 = vunpack.c.l.b16 %v322
      %v339 = vunpack.c.l.b16 %v323
      %v340 = vunpack.c.l.b16 %v324
      %v341 = vpack.c.b16 %v334, %v333
      %v342 = vpack.c.b16 %v336, %v335
      %v343 = vpack.c.b16 %v338, %v337
      %v344 = vpack.c.b16 %v340, %v339
      %vm345 = vcmask 261120
      %v347 = vsel %vm345, %v341, 0
      %v350 = vsel %vm345, %v342, 0
      %v353 = vsel %vm345, %v343, 0
      %v356 = vsel %vm345, %v344, 0
      %358 = vmatprep.subr.bf16.mxu0 %v314
      %359 = vmatpush1.bf16.msra.mxu0 %v313
      %360 = vmatprep.subr.bf16.mxu0 %v316
      %361 = vmatpush1.bf16.msra.mxu0 %v315
      %362 = vmatprep.subr.bf16.mxu0 0
      %363 = vmatpush1.bf16.msra.mxu0 0
      %364 = vmatprep.subr.bf16.mxu0 0
      %365 = vmatpush1.bf16.msra.mxu0 0
      %366 = vmatprep.subr.bf16.mxu0 0
      %367 = vmatpush1.bf16.msra.mxu0 0
      %368 = vmatprep.subr.bf16.mxu0 0
      %369 = vmatpush1.bf16.msra.mxu0 0
      %370 = vmatprep.subr.bf16.mxu0 0
      %371 = vmatpush1.bf16.msra.mxu0 0
      %372 = vmatprep.subr.bf16.mxu0 0
      %373 = vmatpush1.bf16.msra.mxu0 0
      %374 = vmatprep.subr.bf16.mxu0 0
      %375 = vmatpush1.bf16.msra.mxu0 0
      %376 = vmatprep.subr.bf16.mxu0 0
      %377 = vmatpush1.bf16.msra.mxu0 0
      %378 = vmatprep.subr.bf16.mxu0 0
      %379 = vmatpush1.bf16.msra.mxu0 0
      %380 = vmatprep.subr.bf16.mxu0 0
      %381 = vmatpush1.bf16.msra.mxu0 0
      %382 = vmatprep.subr.bf16.mxu0 0
      %383 = vmatpush1.bf16.msra.mxu0 0
      %384 = vmatprep.subr.bf16.mxu0 0
      %385 = vmatpush1.bf16.msra.mxu0 0
      %386 = vmatprep.subr.bf16.mxu0 0
      %387 = vmatpush1.bf16.msra.mxu0 0
      %388 = vmatprep.subr.bf16.mxu0 0
      %389 = vmatpush1.bf16.msra.mxu0 0
      %390 = vmatprep.mubr.bf16.mxu0 0
      %391 = vmatmul.mubr.bf16.gmra.mrb[0].mxu0 %v347
      %v392 = vpop.f32.mrb[0].mxu0
      %v393 = vadd.f32 0.0, %v392
      %v394 = vpop.f32.mrb[0].mxu0
      %v395 = vadd.f32 0.0, %v394
      %v396 = vpop.f32.mrb[0].mxu0
      %v397 = vadd.f32 0.0, %v396
      %v398 = vpop.f32.mrb[0].mxu0
      %v399 = vadd.f32 0.0, %v398
      %400 = vmatprep.mubr.bf16.mxu0 0
      %401 = vmatmul.mubr.bf16.gmra.mrb[0].mxu0 %v350
      %v402 = vpop.f32.mrb[0].mxu0
      %v403 = vadd.f32 0.0, %v402
      %v404 = vpop.f32.mrb[0].mxu0
      %v405 = vadd.f32 0.0, %v404
      %v406 = vpop.f32.mrb[0].mxu0
      %v407 = vadd.f32 0.0, %v406
      %v408 = vpop.f32.mrb[0].mxu0
      %v409 = vadd.f32 0.0, %v408
      %410 = vmatprep.mubr.bf16.mxu0 0
      %411 = vmatmul.mubr.bf16.gmra.mrb[0].mxu0 %v353
      %v412 = vpop.f32.mrb[0].mxu0
      %v413 = vadd.f32 0.0, %v412
      %v414 = vpop.f32.mrb[0].mxu0
      %v415 = vadd.f32 0.0, %v414
      %v416 = vpop.f32.mrb[0].mxu0
      %v417 = vadd.f32 0.0, %v416
      %v418 = vpop.f32.mrb[0].mxu0
      %v419 = vadd.f32 0.0, %v418
      %420 = vmatprep.mubr.bf16.mxu0 0
      %421 = vmatmul.mubr.bf16.gmra.mrb[0].mxu0 %v356
      %v422 = vpop.f32.mrb[0].mxu0
      %v423 = vadd.f32 0.0, %v422
      %v424 = vpop.f32.mrb[0].mxu0
      %v425 = vadd.f32 0.0, %v424
      %v426 = vpop.f32.mrb[0].mxu0
      %v427 = vadd.f32 0.0, %v426
      %v428 = vpop.f32.mrb[0].mxu0
      %v429 = vadd.f32 0.0, %v428
      %430 = vdwg.mxu0
      %v431 = vld [vmem:[%s2] sm:$0xff]
      %v432 = vld [vmem:[%s2 + $0x8] sm:$0xff]
      %v433 = vld [vmem:[%s2 + $0x10] sm:$0xff]
      %v434 = vld [vmem:[%s2 + $0x18] sm:$0xff]
      %436 = vset.pattern.permute.xlu0 0
      %437 = vperm.xlu0 %436, %v431
      %v438 = vpop.permute.xlu0 %437
      %441 = vset.pattern.permute.xlu0 0
      %442 = vperm.xlu0 %441, %v432
      %v443 = vpop.permute.xlu0 %442
      %446 = vset.pattern.permute.xlu0 0
      %447 = vperm.xlu0 %446, %v433
      %v448 = vpop.permute.xlu0 %447
      %451 = vset.pattern.permute.xlu0 0
      %452 = vperm.xlu0 %451, %v434
      %v453 = vpop.permute.xlu0 %452
      %v455 = vadd.f32 %v413, %v438
      %v456 = vadd.f32 %v415, %v438
      %v457 = vadd.f32 %v417, %v443
      %v458 = vadd.f32 %v419, %v443
      %v459 = vadd.f32 %v423, %v448
      %v460 = vadd.f32 %v425, %v448
      %v461 = vadd.f32 %v427, %v453
      %v462 = vadd.f32 %v429, %v453
      %v463 = vpack.c.bf16 %v397, %v393
      %v464 = vpack.c.bf16 %v399, %v395
      %v465 = vpack.c.bf16 %v407, %v403
      %v466 = vpack.c.bf16 %v409, %v405
      %467 = vxpose.xlu0.c.b16.start [1/8] %v463, 128
      %468 = vxpose.xlu0.c.b16.cont [2/8] %v465, 128
      %469 = vxpose.xlu0.c.b16.cont [3/8] 0, 128
      %470 = vxpose.xlu0.c.b16.cont [4/8] 0, 128
      %471 = vxpose.xlu0.c.b16.cont [5/8] 0, 128
      %472 = vxpose.xlu0.c.b16.cont [6/8] 0, 128
      %473 = vxpose.xlu0.c.b16.cont [7/8] 0, 128
      %474 = vxpose.xlu0.c.b16.end [8/8] 0, 128
      %v475 = vpop.trf.xlu0
      %v476 = vpop.trf.xlu0
      %v477 = vpop.trf.xlu0
      %v478 = vpop.trf.xlu0
      %v479 = vpop.trf.xlu0
      %v480 = vpop.trf.xlu0
      %v481 = vpop.trf.xlu0
      %v482 = vpop.trf.xlu0
      %483 = vxpose.xlu0.c.b16.start [1/8] %v464, 128
      %484 = vxpose.xlu0.c.b16.cont [2/8] %v466, 128
      %485 = vxpose.xlu0.c.b16.cont [3/8] 0, 128
      %486 = vxpose.xlu0.c.b16.cont [4/8] 0, 128
      %487 = vxpose.xlu0.c.b16.cont [5/8] 0, 128
      %488 = vxpose.xlu0.c.b16.cont [6/8] 0, 128
      %489 = vxpose.xlu0.c.b16.cont [7/8] 0, 128
      %490 = vxpose.xlu0.c.b16.end [8/8] 0, 128
      %v491 = vpop.trf.xlu0
      %v492 = vpop.trf.xlu0
      %v493 = vpop.trf.xlu0
      %v494 = vpop.trf.xlu0
      %v495 = vpop.trf.xlu0
      %v496 = vpop.trf.xlu0
      %v497 = vpop.trf.xlu0
      %v498 = vpop.trf.xlu0
      %v500 = vsel %vm345, %v475, 0
      %v503 = vsel %vm345, %v476, 0
      %v506 = vsel %vm345, %v477, 0
      %v509 = vsel %vm345, %v478, 0
      %v512 = vsel %vm345, %v479, 0
      %v515 = vsel %vm345, %v480, 0
      %v518 = vsel %vm345, %v481, 0
      %v521 = vsel %vm345, %v482, 0
      %v524 = vsel %vm345, %v491, 0
      %v527 = vsel %vm345, %v492, 0
      %v530 = vsel %vm345, %v493, 0
      %v533 = vsel %vm345, %v494, 0
      %v536 = vsel %vm345, %v495, 0
      %v539 = vsel %vm345, %v496, 0
      %v542 = vsel %vm345, %v497, 0
      %v545 = vsel %vm345, %v498, 0
      %547 = vmatprep.subr.bf16.mxu0 %v464
      %548 = vmatpush1.bf16.msra.mxu0 %v463
      %549 = vmatprep.subr.bf16.mxu0 %v466
      %550 = vmatpush1.bf16.msra.mxu0 %v465
      %551 = vmatprep.subr.bf16.mxu0 0
      %552 = vmatpush1.bf16.msra.mxu0 0
      %553 = vmatprep.subr.bf16.mxu0 0
      %554 = vmatpush1.bf16.msra.mxu0 0
      %555 = vmatprep.subr.bf16.mxu0 0
      %556 = vmatpush1.bf16.msra.mxu0 0
      %557 = vmatprep.subr.bf16.mxu0 0
      %558 = vmatpush1.bf16.msra.mxu0 0
      %559 = vmatprep.subr.bf16.mxu0 0
      %560 = vmatpush1.bf16.msra.mxu0 0
      %561 = vmatprep.subr.bf16.mxu0 0
      %562 = vmatpush1.bf16.msra.mxu0 0
      %563 = vmatprep.subr.bf16.mxu0 0
      %564 = vmatpush1.bf16.msra.mxu0 0
      %565 = vmatprep.subr.bf16.mxu0 0
      %566 = vmatpush1.bf16.msra.mxu0 0
      %567 = vmatprep.subr.bf16.mxu0 0
      %568 = vmatpush1.bf16.msra.mxu0 0
      %569 = vmatprep.subr.bf16.mxu0 0
      %570 = vmatpush1.bf16.msra.mxu0 0
      %571 = vmatprep.subr.bf16.mxu0 0
      %572 = vmatpush1.bf16.msra.mxu0 0
      %573 = vmatprep.subr.bf16.mxu0 0
      %574 = vmatpush1.bf16.msra.mxu0 0
      %575 = vmatprep.subr.bf16.mxu0 0
      %576 = vmatpush1.bf16.msra.mxu0 0
      %577 = vmatprep.subr.bf16.mxu0 0
      %578 = vmatpush1.bf16.msra.mxu0 0
      %579 = vmatprep.mubr.bf16.mxu0 0
      %580 = vmatmul.mubr.bf16.gmra.mrb[0].mxu0 %v500
      %v581 = vpop.f32.mrb[0].mxu0
      %v582 = vadd.f32 0.0, %v581
      %v583 = vpop.f32.mrb[0].mxu0
      %v584 = vadd.f32 0.0, %v583
      %v585 = vpop.f32.mrb[0].mxu0
      %v586 = vadd.f32 0.0, %v585
      %v587 = vpop.f32.mrb[0].mxu0
      %v588 = vadd.f32 0.0, %v587
      %589 = vmatprep.mubr.bf16.mxu0 0
      %590 = vmatmul.mubr.bf16.gmra.mrb[0].mxu0 %v503
      %v591 = vpop.f32.mrb[0].mxu0
      %v592 = vadd.f32 0.0, %v591
      %v593 = vpop.f32.mrb[0].mxu0
      %v594 = vadd.f32 0.0, %v593
      %v595 = vpop.f32.mrb[0].mxu0
      %v596 = vadd.f32 0.0, %v595
      %v597 = vpop.f32.mrb[0].mxu0
      %v598 = vadd.f32 0.0, %v597
      %599 = vmatprep.mubr.bf16.mxu0 0
      %600 = vmatmul.mubr.bf16.gmra.mrb[0].mxu0 %v506
      %v601 = vpop.f32.mrb[0].mxu0
      %v602 = vadd.f32 0.0, %v601
      %v603 = vpop.f32.mrb[0].mxu0
      %v604 = vadd.f32 0.0, %v603
      %v605 = vpop.f32.mrb[0].mxu0
      %v606 = vadd.f32 0.0, %v605
      %v607 = vpop.f32.mrb[0].mxu0
      %v608 = vadd.f32 0.0, %v607
      %609 = vmatprep.mubr.bf16.mxu0 0
      %610 = vmatmul.mubr.bf16.gmra.mrb[0].mxu0 %v509
      %v611 = vpop.f32.mrb[0].mxu0
      %v612 = vadd.f32 0.0, %v611
      %v613 = vpop.f32.mrb[0].mxu0
      %v614 = vadd.f32 0.0, %v613
      %v615 = vpop.f32.mrb[0].mxu0
      %v616 = vadd.f32 0.0, %v615
      %v617 = vpop.f32.mrb[0].mxu0
      %v618 = vadd.f32 0.0, %v617
      %619 = vmatprep.mubr.bf16.mxu0 0
      %620 = vmatmul.mubr.bf16.gmra.mrb[0].mxu0 %v512
      %v621 = vpop.f32.mrb[0].mxu0
      %v622 = vadd.f32 0.0, %v621
      %v623 = vpop.f32.mrb[0].mxu0
      %v624 = vadd.f32 0.0, %v623
      %v625 = vpop.f32.mrb[0].mxu0
      %v626 = vadd.f32 0.0, %v625
      %v627 = vpop.f32.mrb[0].mxu0
      %v628 = vadd.f32 0.0, %v627
      %629 = vmatprep.mubr.bf16.mxu0 0
      %630 = vmatmul.mubr.bf16.gmra.mrb[0].mxu0 %v515
      %v631 = vpop.f32.mrb[0].mxu0
      %v632 = vadd.f32 0.0, %v631
      %v633 = vpop.f32.mrb[0].mxu0
      %v634 = vadd.f32 0.0, %v633
      %v635 = vpop.f32.mrb[0].mxu0
      %v636 = vadd.f32 0.0, %v635
      %v637 = vpop.f32.mrb[0].mxu0
      %v638 = vadd.f32 0.0, %v637
      %639 = vmatprep.mubr.bf16.mxu0 0
      %640 = vmatmul.mubr.bf16.gmra.mrb[0].mxu0 %v518
      %v641 = vpop.f32.mrb[0].mxu0
      %v642 = vadd.f32 0.0, %v641
      %v643 = vpop.f32.mrb[0].mxu0
      %v644 = vadd.f32 0.0, %v643
      %v645 = vpop.f32.mrb[0].mxu0
      %v646 = vadd.f32 0.0, %v645
      %v647 = vpop.f32.mrb[0].mxu0
      %v648 = vadd.f32 0.0, %v647
      %649 = vmatprep.mubr.bf16.mxu0 0
      %650 = vmatmul.mubr.bf16.gmra.mrb[0].mxu0 %v521
      %v651 = vpop.f32.mrb[0].mxu0
      %v652 = vadd.f32 0.0, %v651
      %v653 = vpop.f32.mrb[0].mxu0
      %v654 = vadd.f32 0.0, %v653
      %v655 = vpop.f32.mrb[0].mxu0
      %v656 = vadd.f32 0.0, %v655
      %v657 = vpop.f32.mrb[0].mxu0
      %v658 = vadd.f32 0.0, %v657
      %659 = vmatprep.mubr.bf16.mxu0 0
      %660 = vmatmul.mubr.bf16.gmra.mrb[0].mxu0 %v524
      %v661 = vpop.f32.mrb[0].mxu0
      %v662 = vadd.f32 0.0, %v661
      %v663 = vpop.f32.mrb[0].mxu0
      %v664 = vadd.f32 0.0, %v663
      %v665 = vpop.f32.mrb[0].mxu0
      %v666 = vadd.f32 0.0, %v665
      %v667 = vpop.f32.mrb[0].mxu0
      %v668 = vadd.f32 0.0, %v667
      %669 = vmatprep.mubr.bf16.mxu0 0
      %670 = vmatmul.mubr.bf16.gmra.mrb[0].mxu0 %v527
      %v671 = vpop.f32.mrb[0].mxu0
      %v672 = vadd.f32 0.0, %v671
      %v673 = vpop.f32.mrb[0].mxu0
      %v674 = vadd.f32 0.0, %v673
      %v675 = vpop.f32.mrb[0].mxu0
      %v676 = vadd.f32 0.0, %v675
      %v677 = vpop.f32.mrb[0].mxu0
      %v678 = vadd.f32 0.0, %v677
      %679 = vmatprep.mubr.bf16.mxu0 0
      %680 = vmatmul.mubr.bf16.gmra.mrb[0].mxu0 %v530
      %v681 = vpop.f32.mrb[0].mxu0
      %v682 = vadd.f32 0.0, %v681
      %v683 = vpop.f32.mrb[0].mxu0
      %v684 = vadd.f32 0.0, %v683
      %v685 = vpop.f32.mrb[0].mxu0
      %v686 = vadd.f32 0.0, %v685
      %v687 = vpop.f32.mrb[0].mxu0
      %v688 = vadd.f32 0.0, %v687
      %689 = vmatprep.mubr.bf16.mxu0 0
      %690 = vmatmul.mubr.bf16.gmra.mrb[0].mxu0 %v533
      %v691 = vpop.f32.mrb[0].mxu0
      %v692 = vadd.f32 0.0, %v691
      %v693 = vpop.f32.mrb[0].mxu0
      %v694 = vadd.f32 0.0, %v693
      %v695 = vpop.f32.mrb[0].mxu0
      %v696 = vadd.f32 0.0, %v695
      %v697 = vpop.f32.mrb[0].mxu0
      %v698 = vadd.f32 0.0, %v697
      %699 = vmatprep.mubr.bf16.mxu0 0
      %700 = vmatmul.mubr.bf16.gmra.mrb[0].mxu0 %v536
      %v701 = vpop.f32.mrb[0].mxu0
      %v702 = vadd.f32 0.0, %v701
      %v703 = vpop.f32.mrb[0].mxu0
      %v704 = vadd.f32 0.0, %v703
      %v705 = vpop.f32.mrb[0].mxu0
      %v706 = vadd.f32 0.0, %v705
      %v707 = vpop.f32.mrb[0].mxu0
      %v708 = vadd.f32 0.0, %v707
      %709 = vmatprep.mubr.bf16.mxu0 0
      %710 = vmatmul.mubr.bf16.gmra.mrb[0].mxu0 %v539
      %v711 = vpop.f32.mrb[0].mxu0
      %v712 = vadd.f32 0.0, %v711
      %v713 = vpop.f32.mrb[0].mxu0
      %v714 = vadd.f32 0.0, %v713
      %v715 = vpop.f32.mrb[0].mxu0
      %v716 = vadd.f32 0.0, %v715
      %v717 = vpop.f32.mrb[0].mxu0
      %v718 = vadd.f32 0.0, %v717
      %719 = vmatprep.mubr.bf16.mxu0 0
      %720 = vmatmul.mubr.bf16.gmra.mrb[0].mxu0 %v542
      %v721 = vpop.f32.mrb[0].mxu0
      %v722 = vadd.f32 0.0, %v721
      %v723 = vpop.f32.mrb[0].mxu0
      %v724 = vadd.f32 0.0, %v723
      %v725 = vpop.f32.mrb[0].mxu0
      %v726 = vadd.f32 0.0, %v725
      %v727 = vpop.f32.mrb[0].mxu0
      %v728 = vadd.f32 0.0, %v727
      %729 = vmatprep.mubr.bf16.mxu0 0
      %730 = vmatmul.mubr.bf16.gmra.mrb[0].mxu0 %v545
      %v731 = vpop.f32.mrb[0].mxu0
      %v732 = vadd.f32 0.0, %v731
      %v733 = vpop.f32.mrb[0].mxu0
      %v734 = vadd.f32 0.0, %v733
      %v735 = vpop.f32.mrb[0].mxu0
      %v736 = vadd.f32 0.0, %v735
      %v737 = vpop.f32.mrb[0].mxu0
      %v738 = vadd.f32 0.0, %v737
      %739 = vdwg.mxu0
      %v740 = vmax.f32 %v582, %v584
      %741 = vmax.xlane.f32.xlu0 %v740
      %v742 = vpop.xlane.xlu0 %741
      %v743 = vmax.f32 %v586, %v588
      %744 = vmax.xlane.f32.xlu0 %v743
      %v745 = vpop.xlane.xlu0 %744
      %v746 = vmax.f32 %v592, %v594
      %747 = vmax.xlane.f32.xlu0 %v746
      %v748 = vpop.xlane.xlu0 %747
      %v749 = vmax.f32 %v596, %v598
      %750 = vmax.xlane.f32.xlu0 %v749
      %v751 = vpop.xlane.xlu0 %750
      %v752 = vmax.f32 %v602, %v604
      %753 = vmax.xlane.f32.xlu0 %v752
      %v754 = vpop.xlane.xlu0 %753
      %v755 = vmax.f32 %v606, %v608
      %756 = vmax.xlane.f32.xlu0 %v755
      %v757 = vpop.xlane.xlu0 %756
      %v758 = vmax.f32 %v612, %v614
      %759 = vmax.xlane.f32.xlu0 %v758
      %v760 = vpop.xlane.xlu0 %759
      %v761 = vmax.f32 %v616, %v618
      %762 = vmax.xlane.f32.xlu0 %v761
      %v763 = vpop.xlane.xlu0 %762
      %v764 = vmax.f32 %v622, %v624
      %765 = vmax.xlane.f32.xlu0 %v764
      %v766 = vpop.xlane.xlu0 %765
      %v767 = vmax.f32 %v626, %v628
      %768 = vmax.xlane.f32.xlu0 %v767
      %v769 = vpop.xlane.xlu0 %768
      %v770 = vmax.f32 %v632, %v634
      %771 = vmax.xlane.f32.xlu0 %v770
      %v772 = vpop.xlane.xlu0 %771
      %v773 = vmax.f32 %v636, %v638
      %774 = vmax.xlane.f32.xlu0 %v773
      %v775 = vpop.xlane.xlu0 %774
      %v776 = vmax.f32 %v642, %v644
      %777 = vmax.xlane.f32.xlu0 %v776
      %v778 = vpop.xlane.xlu0 %777
      %v779 = vmax.f32 %v646, %v648
      %780 = vmax.xlane.f32.xlu0 %v779
      %v781 = vpop.xlane.xlu0 %780
      %v782 = vmax.f32 %v652, %v654
      %783 = vmax.xlane.f32.xlu0 %v782
      %v784 = vpop.xlane.xlu0 %783
      %v785 = vmax.f32 %v656, %v658
      %786 = vmax.xlane.f32.xlu0 %v785
      %v787 = vpop.xlane.xlu0 %786
      %v788 = vmax.f32 %v662, %v664
      %789 = vmax.xlane.f32.xlu0 %v788
      %v790 = vpop.xlane.xlu0 %789
      %v791 = vmax.f32 %v666, %v668
      %792 = vmax.xlane.f32.xlu0 %v791
      %v793 = vpop.xlane.xlu0 %792
      %v794 = vmax.f32 %v672, %v674
      %795 = vmax.xlane.f32.xlu0 %v794
      %v796 = vpop.xlane.xlu0 %795
      %v797 = vmax.f32 %v676, %v678
      %798 = vmax.xlane.f32.xlu0 %v797
      %v799 = vpop.xlane.xlu0 %798
      %v800 = vmax.f32 %v682, %v684
      %801 = vmax.xlane.f32.xlu0 %v800
      %v802 = vpop.xlane.xlu0 %801
      %v803 = vmax.f32 %v686, %v688
      %804 = vmax.xlane.f32.xlu0 %v803
      %v805 = vpop.xlane.xlu0 %804
      %v806 = vmax.f32 %v692, %v694
      %807 = vmax.xlane.f32.xlu0 %v806
      %v808 = vpop.xlane.xlu0 %807
      %v809 = vmax.f32 %v696, %v698
      %810 = vmax.xlane.f32.xlu0 %v809
      %v811 = vpop.xlane.xlu0 %810
      %v812 = vmax.f32 %v702, %v704
      %813 = vmax.xlane.f32.xlu0 %v812
      %v814 = vpop.xlane.xlu0 %813
      %v815 = vmax.f32 %v706, %v708
      %816 = vmax.xlane.f32.xlu0 %v815
      %v817 = vpop.xlane.xlu0 %816
      %v818 = vmax.f32 %v712, %v714
      %819 = vmax.xlane.f32.xlu0 %v818
      %v820 = vpop.xlane.xlu0 %819
      %v821 = vmax.f32 %v716, %v718
      %822 = vmax.xlane.f32.xlu0 %v821
      %v823 = vpop.xlane.xlu0 %822
      %v824 = vmax.f32 %v722, %v724
      %825 = vmax.xlane.f32.xlu0 %v824
      %v826 = vpop.xlane.xlu0 %825
      %v827 = vmax.f32 %v726, %v728
      %828 = vmax.xlane.f32.xlu0 %v827
      %v829 = vpop.xlane.xlu0 %828
      %v830 = vmax.f32 %v732, %v734
      %831 = vmax.xlane.f32.xlu0 %v830
      %v832 = vpop.xlane.xlu0 %831
      %v833 = vmax.f32 %v736, %v738
      %834 = vmax.xlane.f32.xlu0 %v833
      %v835 = vpop.xlane.xlu0 %834
      %v836 = vsub.f32 %v582, %v742
      %v837 = vsub.f32 %v584, %v742
      %v838 = vsub.f32 %v586, %v745
      %v839 = vsub.f32 %v588, %v745
      %v840 = vsub.f32 %v592, %v748
      %v841 = vsub.f32 %v594, %v748
      %v842 = vsub.f32 %v596, %v751
      %v843 = vsub.f32 %v598, %v751
      %v844 = vsub.f32 %v602, %v754
      %v845 = vsub.f32 %v604, %v754
      %v846 = vsub.f32 %v606, %v757
      %v847 = vsub.f32 %v608, %v757
      %v848 = vsub.f32 %v612, %v760
      %v849 = vsub.f32 %v614, %v760
      %v850 = vsub.f32 %v616, %v763
      %v851 = vsub.f32 %v618, %v763
      %v852 = vsub.f32 %v622, %v766
      %v853 = vsub.f32 %v624, %v766
      %v854 = vsub.f32 %v626, %v769
      %v855 = vsub.f32 %v628, %v769
      %v856 = vsub.f32 %v632, %v772
      %v857 = vsub.f32 %v634, %v772
      %v858 = vsub.f32 %v636, %v775
      %v859 = vsub.f32 %v638, %v775
      %v860 = vsub.f32 %v642, %v778
      %v861 = vsub.f32 %v644, %v778
      %v862 = vsub.f32 %v646, %v781
      %v863 = vsub.f32 %v648, %v781
      %v864 = vsub.f32 %v652, %v784
      %v865 = vsub.f32 %v654, %v784
      %v866 = vsub.f32 %v656, %v787
      %v867 = vsub.f32 %v658, %v787
      %v868 = vsub.f32 %v662, %v790
      %v869 = vsub.f32 %v664, %v790
      %v870 = vsub.f32 %v666, %v793
      %v871 = vsub.f32 %v668, %v793
      %v872 = vsub.f32 %v672, %v796
      %v873 = vsub.f32 %v674, %v796
      %v874 = vsub.f32 %v676, %v799
      %v875 = vsub.f32 %v678, %v799
      %v876 = vsub.f32 %v682, %v802
      %v877 = vsub.f32 %v684, %v802
      %v878 = vsub.f32 %v686, %v805
      %v879 = vsub.f32 %v688, %v805
      %v880 = vsub.f32 %v692, %v808
      %v881 = vsub.f32 %v694, %v808
      %v882 = vsub.f32 %v696, %v811
      %v883 = vsub.f32 %v698, %v811
      %v884 = vsub.f32 %v702, %v814
      %v885 = vsub.f32 %v704, %v814
      %v886 = vsub.f32 %v706, %v817
      %v887 = vsub.f32 %v708, %v817
      %v888 = vsub.f32 %v712, %v820
      %v889 = vsub.f32 %v714, %v820
      %v890 = vsub.f32 %v716, %v823
      %v891 = vsub.f32 %v718, %v823
      %v892 = vsub.f32 %v722, %v826
      %v893 = vsub.f32 %v724, %v826
      %v894 = vsub.f32 %v726, %v829
      %v895 = vsub.f32 %v728, %v829
      %v896 = vsub.f32 %v732, %v832
      %v897 = vsub.f32 %v734, %v832
      %v898 = vsub.f32 %v736, %v835
      %v899 = vsub.f32 %v738, %v835
      %v900 = vmul.f32 %v836, 1.442695
      %v901 = vpow.pop %v900
      %v902 = vmul.f32 %v837, 1.442695
      %v903 = vpow.pop %v902
      %v904 = vmul.f32 %v838, 1.442695
      %v905 = vpow.pop %v904
      %v906 = vmul.f32 %v839, 1.442695
      %v907 = vpow.pop %v906
      %v908 = vmul.f32 %v840, 1.442695
      %v909 = vpow.pop %v908
      %v910 = vmul.f32 %v841, 1.442695
      %v911 = vpow.pop %v910
      %v912 = vmul.f32 %v842, 1.442695
      %v913 = vpow.pop %v912
      %v914 = vmul.f32 %v843, 1.442695
      %v915 = vpow.pop %v914
      %v916 = vmul.f32 %v844, 1.442695
      %v917 = vpow.pop %v916
      %v918 = vmul.f32 %v845, 1.442695
      %v919 = vpow.pop %v918
      %v920 = vmul.f32 %v846, 1.442695
      %v921 = vpow.pop %v920
      %v922 = vmul.f32 %v847, 1.442695
      %v923 = vpow.pop %v922
      %v924 = vmul.f32 %v848, 1.442695
      %v925 = vpow.pop %v924
      %v926 = vmul.f32 %v849, 1.442695
      %v927 = vpow.pop %v926
      %v928 = vmul.f32 %v850, 1.442695
      %v929 = vpow.pop %v928
      %v930 = vmul.f32 %v851, 1.442695
      %v931 = vpow.pop %v930
      %v932 = vmul.f32 %v852, 1.442695
      %v933 = vpow.pop %v932
      %v934 = vmul.f32 %v853, 1.442695
      %v935 = vpow.pop %v934
      %v936 = vmul.f32 %v854, 1.442695
      %v937 = vpow.pop %v936
      %v938 = vmul.f32 %v855, 1.442695
      %v939 = vpow.pop %v938
      %v940 = vmul.f32 %v856, 1.442695
      %v941 = vpow.pop %v940
      %v942 = vmul.f32 %v857, 1.442695
      %v943 = vpow.pop %v942
      %v944 = vmul.f32 %v858, 1.442695
      %v945 = vpow.pop %v944
      %v946 = vmul.f32 %v859, 1.442695
      %v947 = vpow.pop %v946
      %v948 = vmul.f32 %v860, 1.442695
      %v949 = vpow.pop %v948
      %v950 = vmul.f32 %v861, 1.442695
      %v951 = vpow.pop %v950
      %v952 = vmul.f32 %v862, 1.442695
      %v953 = vpow.pop %v952
      %v954 = vmul.f32 %v863, 1.442695
      %v955 = vpow.pop %v954
      %v956 = vmul.f32 %v864, 1.442695
      %v957 = vpow.pop %v956
      %v958 = vmul.f32 %v865, 1.442695
      %v959 = vpow.pop %v958
      %v960 = vmul.f32 %v866, 1.442695
      %v961 = vpow.pop %v960
      %v962 = vmul.f32 %v867, 1.442695
      %v963 = vpow.pop %v962
      %v964 = vmul.f32 %v868, 1.442695
      %v965 = vpow.pop %v964
      %v966 = vmul.f32 %v869, 1.442695
      %v967 = vpow.pop %v966
      %v968 = vmul.f32 %v870, 1.442695
      %v969 = vpow.pop %v968
      %v970 = vmul.f32 %v871, 1.442695
      %v971 = vpow.pop %v970
      %v972 = vmul.f32 %v872, 1.442695
      %v973 = vpow.pop %v972
      %v974 = vmul.f32 %v873, 1.442695
      %v975 = vpow.pop %v974
      %v976 = vmul.f32 %v874, 1.442695
      %v977 = vpow.pop %v976
      %v978 = vmul.f32 %v875, 1.442695
      %v979 = vpow.pop %v978
      %v980 = vmul.f32 %v876, 1.442695
      %v981 = vpow.pop %v980
      %v982 = vmul.f32 %v877, 1.442695
      %v983 = vpow.pop %v982
      %v984 = vmul.f32 %v878, 1.442695
      %v985 = vpow.pop %v984
      %v986 = vmul.f32 %v879, 1.442695
      %v987 = vpow.pop %v986
      %v988 = vmul.f32 %v880, 1.442695
      %v989 = vpow.pop %v988
      %v990 = vmul.f32 %v881, 1.442695
      %v991 = vpow.pop %v990
      %v992 = vmul.f32 %v882, 1.442695
      %v993 = vpow.pop %v992
      %v994 = vmul.f32 %v883, 1.442695
      %v995 = vpow.pop %v994
      %v996 = vmul.f32 %v884, 1.442695
      %v997 = vpow.pop %v996
      %v998 = vmul.f32 %v885, 1.442695
      %v999 = vpow.pop %v998
      %v1000 = vmul.f32 %v886, 1.442695
      %v1001 = vpow.pop %v1000
      %v1002 = vmul.f32 %v887, 1.442695
      %v1003 = vpow.pop %v1002
      %v1004 = vmul.f32 %v888, 1.442695
      %v1005 = vpow.pop %v1004
      %v1006 = vmul.f32 %v889, 1.442695
      %v1007 = vpow.pop %v1006
      %v1008 = vmul.f32 %v890, 1.442695
      %v1009 = vpow.pop %v1008
      %v1010 = vmul.f32 %v891, 1.442695
      %v1011 = vpow.pop %v1010
      %v1012 = vmul.f32 %v892, 1.442695
      %v1013 = vpow.pop %v1012
      %v1014 = vmul.f32 %v893, 1.442695
      %v1015 = vpow.pop %v1014
      %v1016 = vmul.f32 %v894, 1.442695
      %v1017 = vpow.pop %v1016
      %v1018 = vmul.f32 %v895, 1.442695
      %v1019 = vpow.pop %v1018
      %v1020 = vmul.f32 %v896, 1.442695
      %v1021 = vpow.pop %v1020
      %v1022 = vmul.f32 %v897, 1.442695
      %v1023 = vpow.pop %v1022
      %v1024 = vmul.f32 %v898, 1.442695
      %v1025 = vpow.pop %v1024
      %v1026 = vmul.f32 %v899, 1.442695
      %v1027 = vpow.pop %v1026
      %v1028 = vadd.f32 %v901, %v903
      %1029 = vadd.xlane.f32.xlu0 %v1028
      %v1030 = vpop.xlane.xlu0 %1029
      %v1031 = vadd.f32 %v905, %v907
      %1032 = vadd.xlane.f32.xlu0 %v1031
      %v1033 = vpop.xlane.xlu0 %1032
      %v1034 = vadd.f32 %v909, %v911
      %1035 = vadd.xlane.f32.xlu0 %v1034
      %v1036 = vpop.xlane.xlu0 %1035
      %v1037 = vadd.f32 %v913, %v915
      %1038 = vadd.xlane.f32.xlu0 %v1037
      %v1039 = vpop.xlane.xlu0 %1038
      %v1040 = vadd.f32 %v917, %v919
      %1041 = vadd.xlane.f32.xlu0 %v1040
      %v1042 = vpop.xlane.xlu0 %1041
      %v1043 = vadd.f32 %v921, %v923
      %1044 = vadd.xlane.f32.xlu0 %v1043
      %v1045 = vpop.xlane.xlu0 %1044
      %v1046 = vadd.f32 %v925, %v927
      %1047 = vadd.xlane.f32.xlu0 %v1046
      %v1048 = vpop.xlane.xlu0 %1047
      %v1049 = vadd.f32 %v929, %v931
      %1050 = vadd.xlane.f32.xlu0 %v1049
      %v1051 = vpop.xlane.xlu0 %1050
      %v1052 = vadd.f32 %v933, %v935
      %1053 = vadd.xlane.f32.xlu0 %v1052
      %v1054 = vpop.xlane.xlu0 %1053
      %v1055 = vadd.f32 %v937, %v939
      %1056 = vadd.xlane.f32.xlu0 %v1055
      %v1057 = vpop.xlane.xlu0 %1056
      %v1058 = vadd.f32 %v941, %v943
      %1059 = vadd.xlane.f32.xlu0 %v1058
      %v1060 = vpop.xlane.xlu0 %1059
      %v1061 = vadd.f32 %v945, %v947
      %1062 = vadd.xlane.f32.xlu0 %v1061
      %v1063 = vpop.xlane.xlu0 %1062
      %v1064 = vadd.f32 %v949, %v951
      %1065 = vadd.xlane.f32.xlu0 %v1064
      %v1066 = vpop.xlane.xlu0 %1065
      %v1067 = vadd.f32 %v953, %v955
      %1068 = vadd.xlane.f32.xlu0 %v1067
      %v1069 = vpop.xlane.xlu0 %1068
      %v1070 = vadd.f32 %v957, %v959
      %1071 = vadd.xlane.f32.xlu0 %v1070
      %v1072 = vpop.xlane.xlu0 %1071
      %v1073 = vadd.f32 %v961, %v963
      %1074 = vadd.xlane.f32.xlu0 %v1073
      %v1075 = vpop.xlane.xlu0 %1074
      %v1076 = vadd.f32 %v965, %v967
      %1077 = vadd.xlane.f32.xlu0 %v1076
      %v1078 = vpop.xlane.xlu0 %1077
      %v1079 = vadd.f32 %v969, %v971
      %1080 = vadd.xlane.f32.xlu0 %v1079
      %v1081 = vpop.xlane.xlu0 %1080
      %v1082 = vadd.f32 %v973, %v975
      %1083 = vadd.xlane.f32.xlu0 %v1082
      %v1084 = vpop.xlane.xlu0 %1083
      %v1085 = vadd.f32 %v977, %v979
      %1086 = vadd.xlane.f32.xlu0 %v1085
      %v1087 = vpop.xlane.xlu0 %1086
      %v1088 = vadd.f32 %v981, %v983
      %1089 = vadd.xlane.f32.xlu0 %v1088
      %v1090 = vpop.xlane.xlu0 %1089
      %v1091 = vadd.f32 %v985, %v987
      %1092 = vadd.xlane.f32.xlu0 %v1091
      %v1093 = vpop.xlane.xlu0 %1092
      %v1094 = vadd.f32 %v989, %v991
      %1095 = vadd.xlane.f32.xlu0 %v1094
      %v1096 = vpop.xlane.xlu0 %1095
      %v1097 = vadd.f32 %v993, %v995
      %1098 = vadd.xlane.f32.xlu0 %v1097
      %v1099 = vpop.xlane.xlu0 %1098
      %v1100 = vadd.f32 %v997, %v999
      %1101 = vadd.xlane.f32.xlu0 %v1100
      %v1102 = vpop.xlane.xlu0 %1101
      %v1103 = vadd.f32 %v1001, %v1003
      %1104 = vadd.xlane.f32.xlu0 %v1103
      %v1105 = vpop.xlane.xlu0 %1104
      %v1106 = vadd.f32 %v1005, %v1007
      %1107 = vadd.xlane.f32.xlu0 %v1106
      %v1108 = vpop.xlane.xlu0 %1107
      %v1109 = vadd.f32 %v1009, %v1011
      %1110 = vadd.xlane.f32.xlu0 %v1109
      %v1111 = vpop.xlane.xlu0 %1110
      %v1112 = vadd.f32 %v1013, %v1015
      %1113 = vadd.xlane.f32.xlu0 %v1112
      %v1114 = vpop.xlane.xlu0 %1113
      %v1115 = vadd.f32 %v1017, %v1019
      %1116 = vadd.xlane.f32.xlu0 %v1115
      %v1117 = vpop.xlane.xlu0 %1116
      %v1118 = vadd.f32 %v1021, %v1023
      %1119 = vadd.xlane.f32.xlu0 %v1118
      %v1120 = vpop.xlane.xlu0 %1119
      %v1121 = vadd.f32 %v1025, %v1027
      %1122 = vadd.xlane.f32.xlu0 %v1121
      %v1123 = vpop.xlane.xlu0 %1122
      %v1124 = vrcp.pop %v1030
      %v1125 = vrcp.pop %v1033
      %v1126 = vrcp.pop %v1036
      %v1127 = vrcp.pop %v1039
      %v1128 = vrcp.pop %v1042
      %v1129 = vrcp.pop %v1045
      %v1130 = vrcp.pop %v1048
      %v1131 = vrcp.pop %v1051
      %v1132 = vrcp.pop %v1054
      %v1133 = vrcp.pop %v1057
      %v1134 = vrcp.pop %v1060
      %v1135 = vrcp.pop %v1063
      %v1136 = vrcp.pop %v1066
      %v1137 = vrcp.pop %v1069
      %v1138 = vrcp.pop %v1072
      %v1139 = vrcp.pop %v1075
      %v1140 = vrcp.pop %v1078
      %v1141 = vrcp.pop %v1081
      %v1142 = vrcp.pop %v1084
      %v1143 = vrcp.pop %v1087
      %v1144 = vrcp.pop %v1090
      %v1145 = vrcp.pop %v1093
      %v1146 = vrcp.pop %v1096
      %v1147 = vrcp.pop %v1099
      %v1148 = vrcp.pop %v1102
      %v1149 = vrcp.pop %v1105
      %v1150 = vrcp.pop %v1108
      %v1151 = vrcp.pop %v1111
      %v1152 = vrcp.pop %v1114
      %v1153 = vrcp.pop %v1117
      %v1154 = vrcp.pop %v1120
      %v1155 = vrcp.pop %v1123
      %v1156 = vmul.f32 %v901, %v1124
      %v1157 = vmul.f32 %v903, %v1124
      %v1158 = vmul.f32 %v905, %v1125
      %v1159 = vmul.f32 %v907, %v1125
      %v1160 = vmul.f32 %v909, %v1126
      %v1161 = vmul.f32 %v911, %v1126
      %v1162 = vmul.f32 %v913, %v1127
      %v1163 = vmul.f32 %v915, %v1127
      %v1164 = vmul.f32 %v917, %v1128
      %v1165 = vmul.f32 %v919, %v1128
      %v1166 = vmul.f32 %v921, %v1129
      %v1167 = vmul.f32 %v923, %v1129
      %v1168 = vmul.f32 %v925, %v1130
      %v1169 = vmul.f32 %v927, %v1130
      %v1170 = vmul.f32 %v929, %v1131
      %v1171 = vmul.f32 %v931, %v1131
      %v1172 = vmul.f32 %v933, %v1132
      %v1173 = vmul.f32 %v935, %v1132
      %v1174 = vmul.f32 %v937, %v1133
      %v1175 = vmul.f32 %v939, %v1133
      %v1176 = vmul.f32 %v941, %v1134
      %v1177 = vmul.f32 %v943, %v1134
      %v1178 = vmul.f32 %v945, %v1135
      %v1179 = vmul.f32 %v947, %v1135
      %v1180 = vmul.f32 %v949, %v1136
      %v1181 = vmul.f32 %v951, %v1136
      %v1182 = vmul.f32 %v953, %v1137
      %v1183 = vmul.f32 %v955, %v1137
      %v1184 = vmul.f32 %v957, %v1138
      %v1185 = vmul.f32 %v959, %v1138
      %v1186 = vmul.f32 %v961, %v1139
      %v1187 = vmul.f32 %v963, %v1139
      %v1188 = vmul.f32 %v965, %v1140
      %v1189 = vmul.f32 %v967, %v1140
      %v1190 = vmul.f32 %v969, %v1141
      %v1191 = vmul.f32 %v971, %v1141
      %v1192 = vmul.f32 %v973, %v1142
      %v1193 = vmul.f32 %v975, %v1142
      %v1194 = vmul.f32 %v977, %v1143
      %v1195 = vmul.f32 %v979, %v1143
      %v1196 = vmul.f32 %v981, %v1144
      %v1197 = vmul.f32 %v983, %v1144
      %v1198 = vmul.f32 %v985, %v1145
      %v1199 = vmul.f32 %v987, %v1145
      %v1200 = vmul.f32 %v989, %v1146
      %v1201 = vmul.f32 %v991, %v1146
      %v1202 = vmul.f32 %v993, %v1147
      %v1203 = vmul.f32 %v995, %v1147
      %v1204 = vmul.f32 %v997, %v1148
      %v1205 = vmul.f32 %v999, %v1148
      %v1206 = vmul.f32 %v1001, %v1149
      %v1207 = vmul.f32 %v1003, %v1149
      %v1208 = vmul.f32 %v1005, %v1150
      %v1209 = vmul.f32 %v1007, %v1150
      %v1210 = vmul.f32 %v1009, %v1151
      %v1211 = vmul.f32 %v1011, %v1151
      %v1212 = vmul.f32 %v1013, %v1152
      %v1213 = vmul.f32 %v1015, %v1152
      %v1214 = vmul.f32 %v1017, %v1153
      %v1215 = vmul.f32 %v1019, %v1153
      %v1216 = vmul.f32 %v1021, %v1154
      %v1217 = vmul.f32 %v1023, %v1154
      %v1218 = vmul.f32 %v1025, %v1155
      %v1219 = vmul.f32 %v1027, %v1155
      %v1220 = vpack.c.bf16 %v1158, %v1156
      %v1221 = vpack.c.bf16 %v1159, %v1157
      %v1222 = vpack.c.bf16 %v1162, %v1160
      %v1223 = vpack.c.bf16 %v1163, %v1161
      %v1224 = vpack.c.bf16 %v1166, %v1164
      %v1225 = vpack.c.bf16 %v1167, %v1165
      %v1226 = vpack.c.bf16 %v1170, %v1168
      %v1227 = vpack.c.bf16 %v1171, %v1169
      %v1228 = vpack.c.bf16 %v1174, %v1172
      %v1229 = vpack.c.bf16 %v1175, %v1173
      %v1230 = vpack.c.bf16 %v1178, %v1176
      %v1231 = vpack.c.bf16 %v1179, %v1177
      %v1232 = vpack.c.bf16 %v1182, %v1180
      %v1233 = vpack.c.bf16 %v1183, %v1181
      %v1234 = vpack.c.bf16 %v1186, %v1184
      %v1235 = vpack.c.bf16 %v1187, %v1185
      %v1236 = vpack.c.bf16 %v1190, %v1188
      %v1237 = vpack.c.bf16 %v1191, %v1189
      %v1238 = vpack.c.bf16 %v1194, %v1192
      %v1239 = vpack.c.bf16 %v1195, %v1193
      %v1240 = vpack.c.bf16 %v1198, %v1196
      %v1241 = vpack.c.bf16 %v1199, %v1197
      %v1242 = vpack.c.bf16 %v1202, %v1200
      %v1243 = vpack.c.bf16 %v1203, %v1201
      %v1244 = vpack.c.bf16 %v1206, %v1204
      %v1245 = vpack.c.bf16 %v1207, %v1205
      %v1246 = vpack.c.bf16 %v1210, %v1208
      %v1247 = vpack.c.bf16 %v1211, %v1209
      %v1248 = vpack.c.bf16 %v1214, %v1212
      %v1249 = vpack.c.bf16 %v1215, %v1213
      %v1250 = vpack.c.bf16 %v1218, %v1216
      %v1251 = vpack.c.bf16 %v1219, %v1217
      %v1252 = vlaneseq
      %v1253 = vshrl.u32 %v1252, 7
      %vm1254 = vcmp.eq.s32.totalorder %v1253, 0
      %v1255 = vsel %vm1254, 1, 0
      %v1256 = vcvt.s32.f32 %v1255
      %v1257 = vpack.c.bf16 %v457, %v455
      %v1258 = vpack.c.bf16 %v458, %v456
      %v1259 = vpack.c.bf16 %v461, %v459
      %v1260 = vpack.c.bf16 %v462, %v460
      %v1261 = vpack.c.bf16 %v1256, %v1256
      %1262 = vmatprep.subr.bf16.mxu0 %v1221
      %1263 = vmatpush1.bf16.msra.mxu0 %v1220
      %1264 = vmatprep.subr.bf16.mxu0 %v1223
      %1265 = vmatpush1.bf16.msra.mxu0 %v1222
      %1266 = vmatprep.subr.bf16.mxu0 %v1225
      %1267 = vmatpush1.bf16.msra.mxu0 %v1224
      %1268 = vmatprep.subr.bf16.mxu0 %v1227
      %1269 = vmatpush1.bf16.msra.mxu0 %v1226
      %1270 = vmatprep.subr.bf16.mxu0 %v1229
      %1271 = vmatpush1.bf16.msra.mxu0 %v1228
      %1272 = vmatprep.subr.bf16.mxu0 %v1231
      %1273 = vmatpush1.bf16.msra.mxu0 %v1230
      %1274 = vmatprep.subr.bf16.mxu0 %v1233
      %1275 = vmatpush1.bf16.msra.mxu0 %v1232
      %1276 = vmatprep.subr.bf16.mxu0 %v1235
      %1277 = vmatpush1.bf16.msra.mxu0 %v1234
      %1278 = vmatprep.subr.bf16.mxu0 %v1237
      %1279 = vmatpush1.bf16.msra.mxu0 %v1236
      %1280 = vmatprep.subr.bf16.mxu0 %v1239
      %1281 = vmatpush1.bf16.msra.mxu0 %v1238
      %1282 = vmatprep.subr.bf16.mxu0 %v1241
      %1283 = vmatpush1.bf16.msra.mxu0 %v1240
      %1284 = vmatprep.subr.bf16.mxu0 %v1243
      %1285 = vmatpush1.bf16.msra.mxu0 %v1242
      %1286 = vmatprep.subr.bf16.mxu0 %v1245
      %1287 = vmatpush1.bf16.msra.mxu0 %v1244
      %1288 = vmatprep.subr.bf16.mxu0 %v1247
      %1289 = vmatpush1.bf16.msra.mxu0 %v1246
      %1290 = vmatprep.subr.bf16.mxu0 %v1249
      %1291 = vmatpush1.bf16.msra.mxu0 %v1248
      %1292 = vmatprep.subr.bf16.mxu0 %v1251
      %1293 = vmatpush1.bf16.msra.mxu0 %v1250
      %1294 = vmatprep.mubr.bf16.mxu0 %v1258
      %1295 = vmatmul.mubr.bf16.gmra.mrb[0].mxu0 %v1257
      %v1296 = vpop.f32.mrb[0].mxu0
      %v1297 = vadd.f32 0.0, %v1296
      %v1298 = vpop.f32.mrb[0].mxu0
      %v1299 = vadd.f32 0.0, %v1298
      %v1300 = vpop.f32.mrb[0].mxu0
      %v1301 = vadd.f32 0.0, %v1300
      %v1302 = vpop.f32.mrb[0].mxu0
      %v1303 = vadd.f32 0.0, %v1302
      %1304 = vmatprep.mubr.bf16.mxu0 %v1260
      %1305 = vmatmul.mubr.bf16.gmra.mrb[0].mxu0 %v1259
      %v1306 = vpop.f32.mrb[0].mxu0
      %v1307 = vadd.f32 0.0, %v1306
      %v1308 = vpop.f32.mrb[0].mxu0
      %v1309 = vadd.f32 0.0, %v1308
      %v1310 = vpop.f32.mrb[0].mxu0
      %v1311 = vadd.f32 0.0, %v1310
      %v1312 = vpop.f32.mrb[0].mxu0
      %v1313 = vadd.f32 0.0, %v1312
      %1314 = vmatprep.mubr.bf16.mxu0 %v1261
      %1315 = vmatmul.mubr.bf16.gmra.mrb[0].mxu0 %v1261
      %v1316 = vpop.f32.mrb[0].mxu0
      %v1317 = vadd.f32 0.0, %v1316
      %v1318 = vpop.f32.mrb[0].mxu0
      %v1319 = vadd.f32 0.0, %v1318
      %v1320 = vpop.f32.mrb[0].mxu0
      %v1321 = vpop.f32.mrb[0].mxu0
      %1322 = vdwg.mxu0
      %v1323 = vadd.f32 %v1317, 1e-09
      %v1324 = vadd.f32 %v1319, 1e-09
      %v1325 = vrcp.pop %v1323
      %v1326 = vmul.f32 1.0, %v1325
      %v1327 = vrcp.pop %v1324
      %v1328 = vmul.f32 1.0, %v1327
      %v1329 = vlaneseq
      %v1330 = vshrl.u32 %v1329, 7
      %v1331 = vsub.s32 0, %v1330
      %v1332 = vrot.slane %v1326, %v1331
      %v1333 = vlaneseq
      %v1334 = vshrl.u32 %v1333, 7
      %v1335 = vsub.s32 0, %v1334
      %v1336 = vrot.slane %v1328, %v1335
      %v1337 = vmul.f32 %v1297, %v1332
      %v1338 = vmul.f32 %v1299, %v1336
      %v1339 = vmul.f32 %v1301, %v1332
      %v1340 = vmul.f32 %v1303, %v1336
      %v1341 = vmul.f32 %v1307, %v1332
      %v1342 = vmul.f32 %v1309, %v1336
      %v1343 = vmul.f32 %v1311, %v1332
      %v1344 = vmul.f32 %v1313, %v1336
      %v1345 = vsub.f32 %v305, %v1337
      %v1346 = vsub.f32 %v306, %v1338
      %v1347 = vsub.f32 %v307, %v1339
      %v1348 = vsub.f32 %v308, %v1340
      %v1349 = vsub.f32 %v309, %v1341
      %v1350 = vsub.f32 %v310, %v1342
      %v1351 = vsub.f32 %v311, %v1343
      %v1352 = vsub.f32 %v312, %v1344
      %v1353 = vpack.c.bf16 %v1347, %v1345
      %v1354 = vpack.c.bf16 %v1348, %v1346
      %v1355 = vpack.c.bf16 %v1351, %v1349
      %v1356 = vpack.c.bf16 %v1352, %v1350
      %v1357 = vld [vmem:[%s3] sm:$0xf]
      %v1358 = vld [vmem:[%s3 + $0x4] sm:$0xf]
      %v1359 = vld [vmem:[%s3 + $0x8] sm:$0xf]
      %v1360 = vld [vmem:[%s3 + $0xc] sm:$0xf]
      %v1361 = vld [vmem:[%s4] sm:$0xff]
      %v1362 = vld [vmem:[%s4 + $0x8] sm:$0xff]
      %v1363 = vld [vmem:[%s4 + $0x10] sm:$0xff]
      %v1364 = vld [vmem:[%s4 + $0x18] sm:$0xff]
      %1366 = vset.pattern.permute.xlu0 0
      %1367 = vperm.xlu0 %1366, %v1361
      %v1368 = vpop.permute.xlu0 %1367
      %1371 = vset.pattern.permute.xlu0 0
      %1372 = vperm.xlu0 %1371, %v1362
      %v1373 = vpop.permute.xlu0 %1372
      %1376 = vset.pattern.permute.xlu0 0
      %1377 = vperm.xlu0 %1376, %v1363
      %v1378 = vpop.permute.xlu0 %1377
      %1381 = vset.pattern.permute.xlu0 0
      %1382 = vperm.xlu0 %1381, %v1364
      %v1383 = vpop.permute.xlu0 %1382
      %v1389 = vunpack.c.l.b16 %v1357
      %v1390 = vunpack.c.l.b16 %v1358
      %v1391 = vunpack.c.l.b16 %v1359
      %v1392 = vunpack.c.l.b16 %v1360
      %v1393 = vpack.c.b16 %v1390, %v1389
      %v1394 = vpack.c.b16 %v1392, %v1391
      %v1396 = vsel %vm345, %v1393, 0
      %v1399 = vsel %vm345, %v1394, 0
      %1401 = vmatprep.subr.bf16.mxu0 %v1354
      %1402 = vmatpush1.bf16.msra.mxu0 %v1353
      %1403 = vmatprep.subr.bf16.mxu0 %v1356
      %1404 = vmatpush1.bf16.msra.mxu0 %v1355
      %1405 = vmatprep.subr.bf16.mxu0 0
      %1406 = vmatpush1.bf16.msra.mxu0 0
      %1407 = vmatprep.subr.bf16.mxu0 0
      %1408 = vmatpush1.bf16.msra.mxu0 0
      %1409 = vmatprep.subr.bf16.mxu0 0
      %1410 = vmatpush1.bf16.msra.mxu0 0
      %1411 = vmatprep.subr.bf16.mxu0 0
      %1412 = vmatpush1.bf16.msra.mxu0 0
      %1413 = vmatprep.subr.bf16.mxu0 0
      %1414 = vmatpush1.bf16.msra.mxu0 0
      %1415 = vmatprep.subr.bf16.mxu0 0
      %1416 = vmatpush1.bf16.msra.mxu0 0
      %1417 = vmatprep.subr.bf16.mxu0 0
      %1418 = vmatpush1.bf16.msra.mxu0 0
      %1419 = vmatprep.subr.bf16.mxu0 0
      %1420 = vmatpush1.bf16.msra.mxu0 0
      %1421 = vmatprep.subr.bf16.mxu0 0
      %1422 = vmatpush1.bf16.msra.mxu0 0
      %1423 = vmatprep.subr.bf16.mxu0 0
      %1424 = vmatpush1.bf16.msra.mxu0 0
      %1425 = vmatprep.subr.bf16.mxu0 0
      %1426 = vmatpush1.bf16.msra.mxu0 0
      %1427 = vmatprep.subr.bf16.mxu0 0
      %1428 = vmatpush1.bf16.msra.mxu0 0
      %1429 = vmatprep.subr.bf16.mxu0 0
      %1430 = vmatpush1.bf16.msra.mxu0 0
      %1431 = vmatprep.subr.bf16.mxu0 0
      %1432 = vmatpush1.bf16.msra.mxu0 0
      %1433 = vmatprep.mubr.bf16.mxu0 0
      %1434 = vmatmul.mubr.bf16.gmra.mrb[0].mxu0 %v1396
      %v1435 = vpop.f32.mrb[0].mxu0
      %v1436 = vadd.f32 %v1368, %v1435
      %v1437 = vpop.f32.mrb[0].mxu0
      %v1438 = vadd.f32 %v1368, %v1437
      %v1439 = vpop.f32.mrb[0].mxu0
      %v1440 = vadd.f32 %v1373, %v1439
      %v1441 = vpop.f32.mrb[0].mxu0
      %v1442 = vadd.f32 %v1373, %v1441
      %1443 = vmatprep.mubr.bf16.mxu0 0
      %1444 = vmatmul.mubr.bf16.gmra.mrb[0].mxu0 %v1399
      %v1445 = vpop.f32.mrb[0].mxu0
      %v1446 = vadd.f32 %v1378, %v1445
      %v1447 = vpop.f32.mrb[0].mxu0
      %v1448 = vadd.f32 %v1378, %v1447
      %v1449 = vpop.f32.mrb[0].mxu0
      %v1450 = vadd.f32 %v1383, %v1449
      %v1451 = vpop.f32.mrb[0].mxu0
      %v1452 = vadd.f32 %v1383, %v1451
      %1453 = vdwg.mxu0
      %v1454 = vpack.c.bf16 %v1440, %v1436
      %v1455 = vpack.c.bf16 %v1442, %v1438
      %v1456 = vpack.c.bf16 %v1450, %v1446
      %v1457 = vpack.c.bf16 %v1452, %v1448
      %v1462 = vunpack.c.l.b16 %v1454
      %v1463 = vunpack.c.l.b16 %v1455
      %v1464 = vunpack.c.h.b16 %v1454
      %v1465 = vunpack.c.h.b16 %v1455
      %v1466 = vunpack.c.l.b16 %v1456
      %v1467 = vunpack.c.l.b16 %v1457
      %v1468 = vunpack.c.h.b16 %v1456
      %v1469 = vunpack.c.h.b16 %v1457
      %v1470 = vpack.c.b16 %v1463, %v1462
      %v1471 = vpack.c.b16 %v1465, %v1464
      %v1472 = vpack.c.b16 %v1467, %v1466
      %v1473 = vpack.c.b16 %v1469, %v1468
      %1478 = vst [vmem:[%s293] sm:$0xff] %v1470
      %1479 = vst [vmem:[%s293 + $0x8] sm:$0xff] %v1471
      %1480 = vst [vmem:[%s293 + $0x10] sm:$0xff] %v1472
      %1481 = vst [vmem:[%s293 + $0x18] sm:$0xff] %v1473
      %v1482 = vadd.f32 %v1436, %v1438
      %1483 = vadd.xlane.f32.xlu0 %v1482
      %v1484 = vpop.xlane.xlu0 %1483
      %v1485 = vadd.f32 %v1440, %v1442
      %1486 = vadd.xlane.f32.xlu0 %v1485
      %v1487 = vpop.xlane.xlu0 %1486
      %v1488 = vadd.f32 %v1446, %v1448
      %1489 = vadd.xlane.f32.xlu0 %v1488
      %v1490 = vpop.xlane.xlu0 %1489
      %v1491 = vadd.f32 %v1450, %v1452
      %1492 = vadd.xlane.f32.xlu0 %v1491
      %v1493 = vpop.xlane.xlu0 %1492
      %vm1494 = vcmask 7168
      %1495 = vst.msk [vmem:[%s298] sm:$0xff] %vm1494, %v1484
      %1496 = vst.msk [vmem:[%s298 + $0x8] sm:$0xff] %vm1494, %v1487
      %1497 = vst.msk [vmem:[%s298 + $0x10] sm:$0xff] %vm1494, %v1490
      %1498 = vst.msk [vmem:[%s298 + $0x18] sm:$0xff] %vm1494, %v1493
      %v1499 = vmul.f32 %v1436, %v1436
      %v1500 = vmul.f32 %v1438, %v1438
      %v1501 = vmul.f32 %v1440, %v1440
      %v1502 = vmul.f32 %v1442, %v1442
      %v1503 = vmul.f32 %v1446, %v1446
      %v1504 = vmul.f32 %v1448, %v1448
      %v1505 = vmul.f32 %v1450, %v1450
      %v1506 = vmul.f32 %v1452, %v1452
      %v1507 = vadd.f32 %v1499, %v1500
      %1508 = vadd.xlane.f32.xlu0 %v1507
      %v1509 = vpop.xlane.xlu0 %1508
      %v1510 = vadd.f32 %v1501, %v1502
      %1511 = vadd.xlane.f32.xlu0 %v1510
      %v1512 = vpop.xlane.xlu0 %1511
      %v1513 = vadd.f32 %v1503, %v1504
      %1514 = vadd.xlane.f32.xlu0 %v1513
      %v1515 = vpop.xlane.xlu0 %1514
      %v1516 = vadd.f32 %v1505, %v1506
      %1517 = vadd.xlane.f32.xlu0 %v1516
      %v1518 = vpop.xlane.xlu0 %1517
      %1519 = vst.msk [vmem:[%s303] sm:$0xff] %vm1494, %v1509
      %1520 = vst.msk [vmem:[%s303 + $0x8] sm:$0xff] %vm1494, %v1512
      %1521 = vst.msk [vmem:[%s303 + $0x10] sm:$0xff] %vm1494, %v1515
      %1522 = vst.msk [vmem:[%s303 + $0x18] sm:$0xff] %vm1494, %v1518
      %p1523 = scmp.lt.s32.totalorder %s19, 1
      %s1524 = scalar_select %p1523, %s19, 1
      %s1525 = smul.addr %s1524, 8
      %s1526 = smul.addr %s1525, 4
      %s1527 = scalar_lea.vmem %s5, %s1526
      %p1528 = scmp.lt.s32.totalorder %s19, 1
      %s1529 = scalar_select %p1528, %s19, 1
      %s1530 = smul.addr %s1529, 4
      %s1531 = smul.addr %s1530, 8
      %s1532 = scalar_lea.vmem %s6, %s1531
      %p1533 = scmp.lt.s32.totalorder %s19, 1
      %s1534 = scalar_select %p1533, %s19, 1
      %s1535 = smul.addr %s1534, 4
      %s1536 = smul.addr %s1535, 8
      %s1537 = scalar_lea.vmem %s7, %s1536
      // Predicated region
      $region41: #{sa_layer.2} parent=39 // pred_check
        %p1538 = pneg %p147
      $region42: #{sa_layer.2} parent=39 // pred_check_branch
        %1540 = sbr.rel (%p1538) target = $region44
      $region43: #{sa_layer.2} parent=39 // pred_region
        _
      $region44: #{sa_layer.2} parent=39 // pred_fallthru
        _
      // Predicated region
      $region45: #{sa_layer.2} parent=39 // pred_check
        %p1541 = pneg %p173
      $region46: #{sa_layer.2} parent=39 // pred_check_branch
        %1543 = sbr.rel (%p1541) target = $region48
      $region47: #{sa_layer.2} parent=39 // pred_region
        _
      $region48: #{sa_layer.2} parent=39 // pred_fallthru
        _
      // Predicated region
      $region49: #{sa_layer.2} parent=39 // pred_check
        %p1544 = pneg %p199
      $region50: #{sa_layer.2} parent=39 // pred_check_branch
        %1546 = sbr.rel (%p1544) target = $region52
      $region51: #{sa_layer.2} parent=39 // pred_region
        _
      $region52: #{sa_layer.2} parent=39 // pred_fallthru
        _
    $region40: #{sa_layer.2} parent=5 // pred_fallthru
      _
    %p1547 = scmp.le.s32.totalorder 2, %s14
    // Predicated region
    $region53: #{sa_layer.2} parent=5 // pred_check
      %p1548 = pneg %p1547
    $region54: #{sa_layer.2} parent=5 // pred_check_branch
      %1550 = sbr.rel (%p1548) target = $region56
    $region55: #{sa_layer.2} parent=5 // pred_region
      %s1551 = ssub.s32 %s14, 2
      // Predicated region
      $region57: #{sa_layer.2} parent=55 // pred_check
        %p1552 = pneg %p153
      $region58: #{sa_layer.2} parent=55 // pred_check_branch
        %1554 = sbr.rel (%p1552) target = $region60
      $region59: #{sa_layer.2} parent=55 // pred_region
        %p1555 = scmp.lt.s32.totalorder %s20, 1
        %s1556 = scalar_select %p1555, %s20, 1
        %s1557 = smul.addr %s1556, 8
        %s1558 = smul.addr %s1557, 4
        %s1559 = scalar_lea.vmem %s5, %s1558
      $region60: #{sa_layer.2} parent=55 // pred_fallthru
        _
      // Predicated region
      $region61: #{sa_layer.2} parent=55 // pred_check
        %p1560 = pneg %p179
      $region62: #{sa_layer.2} parent=55 // pred_check_branch
        %1562 = sbr.rel (%p1560) target = $region64
      $region63: #{sa_layer.2} parent=55 // pred_region
        %p1563 = scmp.lt.s32.totalorder %s20, 1
        %s1564 = scalar_select %p1563, %s20, 1
        %s1565 = smul.addr %s1564, 4
        %s1566 = smul.addr %s1565, 8
        %s1567 = scalar_lea.vmem %s6, %s1566
      $region64: #{sa_layer.2} parent=55 // pred_fallthru
        _
      // Predicated region
      $region65: #{sa_layer.2} parent=55 // pred_check
        %p1568 = pneg %p205
      $region66: #{sa_layer.2} parent=55 // pred_check_branch
        %1570 = sbr.rel (%p1568) target = $region68
      $region67: #{sa_layer.2} parent=55 // pred_region
        %p1571 = scmp.lt.s32.totalorder %s20, 1
        %s1572 = scalar_select %p1571, %s20, 1
        %s1573 = smul.addr %s1572, 4
        %s1574 = smul.addr %s1573, 8
        %s1575 = scalar_lea.vmem %s7, %s1574
      $region68: #{sa_layer.2} parent=55 // pred_fallthru
        _
    $region56: #{sa_layer.2} parent=5 // pred_fallthru
      _
  $region6: #{sa_layer.2} parent=0 // loop_footer
    %s18 = sadd.s32 1, %s14
  $region7: #{sa_layer.2} parent=0 // loop_footer_branch
    %13 = sbr.rel target = $region3
  $region8: #{sa_layer.2} parent=0 // loop_exit
    _

</llo_original>
